<compile_context>
chip_gen: v7x
topology: tpu7x:2x2x1
jax: 0.10.0
libtpu: 0.0.40
codegen_flags: <defaults>
</compile_context>

<pallas_src>
import functools
import math

import jax
import jax.numpy as jnp
from jax.experimental import pallas as pl
from jax.experimental.pallas import tpu as pltpu


ATTENTION_HEAD_SIZE = 64          # CONSTANT_ATTENTION_HEAD_SIZE
LAYER_NORM_EPS = 1e-12
_VMEM_LIMIT_BYTES = 40 * 1024 * 1024   # fits v7x's 64 MiB/TC with headroom


def _gelu_exact(x):
    # HF ACT2FN["gelu"]: exact erf-based GELU (f32 math).
    return 0.5 * x * (1.0 + jax.lax.erf(x * (1.0 / math.sqrt(2.0))))


def _pick_tile_m(m, target=512):
    """Largest row tile <= target that divides m.

    Multiples of 16 keep bf16 (16, 128) sublane tiling happy; prefer >=2 grid
    steps so both v7x TensorCores get work.
    """
    cands = (512, 256, 128, 64, 32, 16)
    for c in cands:
        if c <= target and m % c == 0 and m // c >= 2:
            return c
    for c in cands:
        if c <= target and m % c == 0:
            return c
    return m


# ---------------------------------------------------------------------------
# Kernel bodies
# ---------------------------------------------------------------------------

def _dense_kernel(x_ref, w_ref, b_ref, o_ref, *, activation):
    # x_ref: (tm, K) bf16 (streamed); w_ref: (K, N) bf16 (VMEM-resident); b_ref: (1, N) f32.
    acc = jnp.dot(x_ref[...], w_ref[...], preferred_element_type=jnp.float32)
    acc = acc + b_ref[...]
    if activation == "gelu":
        acc = _gelu_exact(acc)
    o_ref[...] = acc.astype(o_ref.dtype)


def _dense_add_ln_kernel(x_ref, w_ref, b_ref, res_ref, g_ref, bt_ref, o_ref, *, eps):
    # LayerNorm(x @ W + b + residual) over the last (lane) dim, all in f32.
    acc = jnp.dot(x_ref[...], w_ref[...], preferred_element_type=jnp.float32)
    acc = acc + b_ref[...] + res_ref[...].astype(jnp.float32)
    mu = jnp.mean(acc, axis=-1, keepdims=True)
    cen = acc - mu
    var = jnp.mean(cen * cen, axis=-1, keepdims=True)
    inv = jax.lax.rsqrt(var + eps)
    o_ref[...] = (cen * inv * g_ref[...] + bt_ref[...]).astype(o_ref.dtype)


def _attention_kernel(q_ref, k_ref, v_ref, mask_ref, o_ref, *, scale):
    # q/k/v: (S, D) bf16 for one (batch, head); mask: (1, S) additive f32.
    s = jax.lax.dot_general(q_ref[...], k_ref[...],
                            (((1,), (1,)), ((), ())),
                            preferred_element_type=jnp.float32)       # (S, S)
    s = s * scale + mask_ref[...]
    m = jnp.max(s, axis=-1, keepdims=True)
    p = jnp.exp(s - m)
    p = p / jnp.sum(p, axis=-1, keepdims=True)
    ctx = jnp.dot(p.astype(v_ref.dtype), v_ref[...],
                  preferred_element_type=jnp.float32)                 # (S, D)
    o_ref[...] = ctx.astype(o_ref.dtype)


# ---------------------------------------------------------------------------
# pallas_call wrappers
# ---------------------------------------------------------------------------

def _dense(x2d, w, b, *, activation="none", out_dtype=jnp.float32, tm_target=512):
    m, k = x2d.shape
    k2, n = w.shape
    assert k == k2
    tm = _pick_tile_m(m, tm_target)
    assert m % tm == 0
    kernel = functools.partial(_dense_kernel, activation=activation)
    return pl.pallas_call(
        kernel,
        out_shape=jax.ShapeDtypeStruct((m, n), out_dtype),
        grid_spec=pltpu.PrefetchScalarGridSpec(
            num_scalar_prefetch=0,
            grid=(m // tm,),
            in_specs=[
                pl.BlockSpec((tm, k), lambda i: (i, 0)),   # activations (streamed)
                pl.BlockSpec((k, n), lambda i: (0, 0)),    # full weight, VMEM-resident
                pl.BlockSpec((1, n), lambda i: (0, 0)),    # bias, resident
            ],
            out_specs=pl.BlockSpec((tm, n), lambda i: (i, 0)),
        ),
        compiler_params=pltpu.CompilerParams(
            dimension_semantics=("parallel",),
            vmem_limit_bytes=_VMEM_LIMIT_BYTES,
        ),
    )(x2d.astype(jnp.bfloat16), w, b)


def _dense_add_ln(x2d, w, b, residual2d, gamma, beta, *, eps=LAYER_NORM_EPS,
                  out_dtype=jnp.float32, tm_target=512):
    m, k = x2d.shape
    k2, n = w.shape
    assert k == k2
    tm = _pick_tile_m(m, tm_target)
    assert m % tm == 0
    kernel = functools.partial(_dense_add_ln_kernel, eps=eps)
    return pl.pallas_call(
        kernel,
        out_shape=jax.ShapeDtypeStruct((m, n), out_dtype),
        grid_spec=pltpu.PrefetchScalarGridSpec(
            num_scalar_prefetch=0,
            grid=(m // tm,),
            in_specs=[
                pl.BlockSpec((tm, k), lambda i: (i, 0)),
                pl.BlockSpec((k, n), lambda i: (0, 0)),    # weight resident
                pl.BlockSpec((1, n), lambda i: (0, 0)),    # bias
                pl.BlockSpec((tm, n), lambda i: (i, 0)),   # residual (streamed)
                pl.BlockSpec((1, n), lambda i: (0, 0)),    # LN gamma
                pl.BlockSpec((1, n), lambda i: (0, 0)),    # LN beta
            ],
            out_specs=pl.BlockSpec((tm, n), lambda i: (i, 0)),
        ),
        compiler_params=pltpu.CompilerParams(
            dimension_semantics=("parallel",),
            vmem_limit_bytes=_VMEM_LIMIT_BYTES,
        ),
    )(x2d.astype(jnp.bfloat16), w, b, residual2d, gamma, beta)


def _multi_head_attention(q, k, v, mask, *, out_dtype=jnp.bfloat16):
    bh, s, d = q.shape
    scale = 1.0 / math.sqrt(d)
    kernel = functools.partial(_attention_kernel, scale=scale)
    return pl.pallas_call(
        kernel,
        out_shape=jax.ShapeDtypeStruct((bh, s, d), out_dtype),
        grid_spec=pltpu.PrefetchScalarGridSpec(
            num_scalar_prefetch=0,
            grid=(bh,),
            in_specs=[
                pl.BlockSpec((None, s, d), lambda i: (i, 0, 0)),
                pl.BlockSpec((None, s, d), lambda i: (i, 0, 0)),
                pl.BlockSpec((None, s, d), lambda i: (i, 0, 0)),
                pl.BlockSpec((None, 1, s), lambda i: (i, 0, 0)),
            ],
            out_specs=pl.BlockSpec((None, s, d), lambda i: (i, 0, 0)),
        ),
        compiler_params=pltpu.CompilerParams(
            dimension_semantics=("parallel",),
            vmem_limit_bytes=_VMEM_LIMIT_BYTES,
        ),
    )(q, k, v, mask)


# ---------------------------------------------------------------------------
# Parameters (PyTorch layout) and one-time preparation
# ---------------------------------------------------------------------------

def init_raw_params(key, hidden_size, num_heads, intermediate_size):
    """Deterministic random params in PyTorch nn.Linear layout ([out, in] weights)."""
    a = num_heads * ATTENTION_HEAD_SIZE
    ks = jax.random.split(key, 10)

    def lin(k, out_dim, in_dim):
        kw, kb = jax.random.split(k)
        w = jax.random.normal(kw, (out_dim, in_dim), jnp.float32) * 0.02
        b = jax.random.normal(kb, (out_dim,), jnp.float32) * 0.02
        return w, b

    raw = {}
    raw["wq"], raw["bq"] = lin(ks[0], a, hidden_size)
    raw["wk"], raw["bk"] = lin(ks[1], a, hidden_size)
    raw["wv"], raw["bv"] = lin(ks[2], a, hidden_size)
    raw["wo"], raw["bo"] = lin(ks[3], hidden_size, a)                 # attention.output.dense
    raw["wi"], raw["bi"] = lin(ks[4], intermediate_size, hidden_size)  # intermediate.dense
    raw["w2"], raw["b2"] = lin(ks[5], hidden_size, intermediate_size)  # output.dense
    raw["g1"] = 1.0 + 0.1 * jax.random.normal(ks[6], (hidden_size,), jnp.float32)
    raw["be1"] = 0.1 * jax.random.normal(ks[7], (hidden_size,), jnp.float32)
    raw["g2"] = 1.0 + 0.1 * jax.random.normal(ks[8], (hidden_size,), jnp.float32)
    raw["be2"] = 0.1 * jax.random.normal(ks[9], (hidden_size,), jnp.float32)
    return raw


def prepare_params(raw):
    """One-time (weight-load time) prep: transpose to [in, out], cast matmul
    operands to bf16, fuse Q/K/V, keep bias / LN params in f32 as (1, N) rows."""
    def wt(w):
        return jnp.asarray(w).T.astype(jnp.bfloat16)

    def vec(v):
        return jnp.asarray(v, jnp.float32).reshape(1, -1)

    p = {}
    p["w_qkv"] = jnp.concatenate([wt(raw["wq"]), wt(raw["wk"]), wt(raw["wv"])], axis=1)
    p["b_qkv"] = jnp.concatenate([vec(raw["bq"]), vec(raw["bk"]), vec(raw["bv"])], axis=1)
    p["w_ao"], p["b_ao"] = wt(raw["wo"]), vec(raw["bo"])
    p["g1"], p["beta1"] = vec(raw["g1"]), vec(raw["be1"])
    p["w_int"], p["b_int"] = wt(raw["wi"]), vec(raw["bi"])
    p["w_out"], p["b_out"] = wt(raw["w2"]), vec(raw["b2"])
    p["g2"], p["beta2"] = vec(raw["g2"]), vec(raw["be2"])
    return p


# ---------------------------------------------------------------------------
# Full BertLayerEx forward (default path)
# ---------------------------------------------------------------------------

def bert_layer_forward(hidden_states, attention_mask, params, num_heads):
    """hidden_states: [B, S, H]; attention_mask: additive [B, S] (0 keep / -1e4 mask) or None."""
    b, s, h = hidden_states.shape
    d = ATTENTION_HEAD_SIZE
    a = num_heads * d
    m = b * s
    x2d = hidden_states.reshape(m, h)

    # --- BertSelfAttentionEx: fused Q/K/V projection, then per-head attention ---
    qkv2d = _dense(x2d, params["w_qkv"], params["b_qkv"],
                   activation="none", out_dtype=jnp.bfloat16)              # (M, 3A)
    qkv = qkv2d.reshape(b, s, 3, num_heads, d)
    q = qkv[:, :, 0].transpose(0, 2, 1, 3).reshape(b * num_heads, s, d)
    k = qkv[:, :, 1].transpose(0, 2, 1, 3).reshape(b * num_heads, s, d)
    v = qkv[:, :, 2].transpose(0, 2, 1, 3).reshape(b * num_heads, s, d)

    if attention_mask is None:
        attention_mask = jnp.zeros((b, s), jnp.float32)
    mask = jnp.broadcast_to(attention_mask.astype(jnp.float32)[:, None, None, :],
                            (b, num_heads, 1, s)).reshape(b * num_heads, 1, s)

    ctx = _multi_head_attention(q, k, v, mask, out_dtype=jnp.bfloat16)     # (B*H, S, D)
    ctx2d = ctx.reshape(b, num_heads, s, d).transpose(0, 2, 1, 3).reshape(m, a)

    # --- BertSelfOutputEx: dense + residual + LayerNorm (dropout = identity) ---
    attn_out = _dense_add_ln(ctx2d, params["w_ao"], params["b_ao"],
                             x2d.astype(jnp.float32), params["g1"], params["beta1"],
                             out_dtype=jnp.float32)                        # (M, H)

    # --- BertIntermediateEx: dense + exact GELU ---
    inter = _dense(attn_out, params["w_int"], params["b_int"],
                   activation="gelu", out_dtype=jnp.bfloat16)              # (M, I)

    # --- BertOutputEx: dense + residual + LayerNorm ---
    out2d = _dense_add_ln(inter, params["w_out"], params["b_out"],
                          attn_out, params["g2"], params["beta2"],
                          out_dtype=hidden_states.dtype)                   # (M, H)
    return out2d.reshape(b, s, h)


# ---------------------------------------------------------------------------
# References
# ---------------------------------------------------------------------------

def bert_layer_reference_mixed(hidden_states, attention_mask, params, num_heads):
    """Pure-JAX reference mirroring the kernel numerics (bf16 matmul operands,
    f32 accumulation / softmax / GELU / LayerNorm)."""
    f32, bf16 = jnp.float32, jnp.bfloat16
    b, s, h = hidden_states.shape
    d = ATTENTION_HEAD_SIZE
    m = b * s
    x2d = hidden_states.reshape(m, h)

    def dense(x, w, bias, act=None, out_dtype=f32):
        y = jnp.dot(x.astype(bf16), w, preferred_element_type=f32) + bias
        if act == "gelu":
            y = _gelu_exact(y)
        return y.astype(out_dtype)

    def dense_add_ln(x, w, bias, res, g, beta):
        y = jnp.dot(x.astype(bf16), w, preferred_element_type=f32) + bias + res.astype(f32)
        mu = jnp.mean(y, -1, keepdims=True)
        cen = y - mu
        var = jnp.mean(cen * cen, -1, keepdims=True)
        return cen * jax.lax.rsqrt(var + LAYER_NORM_EPS) * g + beta

    qkv = dense(x2d, params["w_qkv"], params["b_qkv"], out_dtype=bf16).reshape(b, s, 3, num_heads, d)
    q = qkv[:, :, 0].transpose(0, 2, 1, 3).reshape(b * num_heads, s, d)
    k = qkv[:, :, 1].transpose(0, 2, 1, 3).reshape(b * num_heads, s, d)
    v = qkv[:, :, 2].transpose(0, 2, 1, 3).reshape(b * num_heads, s, d)

    if attention_mask is None:
        attention_mask = jnp.zeros((b, s), f32)
    mask = jnp.broadcast_to(attention_mask.astype(f32)[:, None, None, :],
                            (b, num_heads, 1, s)).reshape(b * num_heads, 1, s)

    sc = jnp.einsum("bqd,bkd->bqk", q, k, preferred_element_type=f32)
    sc = sc * (1.0 / math.sqrt(d)) + mask
    sc = sc - jnp.max(sc, -1, keepdims=True)
    p = jnp.exp(sc)
    p = p / jnp.sum(p, -1, keepdims=True)
    ctx = jnp.einsum("bqk,bkd->bqd", p.astype(bf16), v,
                     preferred_element_type=f32).astype(bf16)
    ctx2d = ctx.reshape(b, num_heads, s, d).transpose(0, 2, 1, 3).reshape(m, num_heads * d)

    attn_out = dense_add_ln(ctx2d, params["w_ao"], params["b_ao"], x2d,
                            params["g1"], params["beta1"])
    inter = dense(attn_out, params["w_int"], params["b_int"], act="gelu", out_dtype=bf16)
    out2d = dense_add_ln(inter, params["w_out"], params["b_out"], attn_out,
                         params["g2"], params["beta2"])
    return out2d.reshape(b, s, h).astype(hidden_states.dtype)


def bert_layer_reference_f32(hidden_states, attention_mask, raw, num_heads):
    """Straight f32 translation of the PyTorch forward (eval mode) for a sanity check."""
    b, s, h = hidden_states.shape
    d = ATTENTION_HEAD_SIZE

    def lin(x, w, bias):
        return jnp.einsum("bso,io->bsi", x, w) + bias

    def split_heads(x):
        return x.reshape(b, s, num_heads, d).transpose(0, 2, 1, 3)

    def ln(x, g, beta):
        mu = jnp.mean(x, -1, keepdims=True)
        var = jnp.mean((x - mu) ** 2, -1, keepdims=True)
        return (x - mu) / jnp.sqrt(var + LAYER_NORM_EPS) * g + beta

    q = split_heads(lin(hidden_states, raw["wq"], raw["bq"]))
    k = split_heads(lin(hidden_states, raw["wk"], raw["bk"]))
    v = split_heads(lin(hidden_states, raw["wv"], raw["bv"]))
    sc = jnp.einsum("bhqd,bhkd->bhqk", q, k) / math.sqrt(d)
    if attention_mask is not None:
        sc = sc + attention_mask[:, None, None, :]
    p = jax.nn.softmax(sc, axis=-1)
    ctx = jnp.einsum("bhqk,bhkd->bhqd", p, v).transpose(0, 2, 1, 3).reshape(b, s, num_heads * d)
    attn_out = ln(lin(ctx, raw["wo"], raw["bo"]) + hidden_states, raw["g1"], raw["be1"])
    inter = _gelu_exact(lin(attn_out, raw["wi"], raw["bi"]))
    return ln(lin(inter, raw["w2"], raw["b2"]) + attn_out, raw["g2"], raw["be2"])


# ---------------------------------------------------------------------------

if __name__ == "__main__":
    batch, seq, hidden_size = 2, 16, 32
    num_heads = 2                                   # all_head_size = 128
    intermediate_size = 128

    key = jax.random.PRNGKey(0)
    k_x, k_p = jax.random.split(key)
    x = jax.random.normal(k_x, (batch, seq, hidden_size), dtype=jnp.float32)
    attn_mask = jnp.zeros((batch, seq), jnp.float32).at[1, -4:].set(-10000.0)

    raw = init_raw_params(k_p, hidden_size, num_heads, intermediate_size)
    params = prepare_params(raw)                    # one-time: transpose + bf16 cast + QKV fuse

    fwd = jax.jit(bert_layer_forward, static_argnames=("num_heads",))
    out = fwd(x, attn_mask, params, num_heads=num_heads)
    out = jax.block_until_ready(out)
    assert out.shape == (batch, seq, hidden_size)

    # Check against a pure-JAX reference with the same mixed-precision numerics.
    ref_mixed = bert_layer_reference_mixed(x, attn_mask, params, num_heads)
    assert jnp.allclose(out, ref_mixed, atol=1e-2, rtol=1e-2)

    # Loose sanity check against the full-f32 PyTorch-equivalent math.
    ref_f32 = bert_layer_reference_f32(x, attn_mask, raw, num_heads)
    assert jnp.allclose(out, ref_f32, atol=1e-1, rtol=1e-1)

    print("KERNEL_OK")
</pallas_src>

<mosaic_0001>
module attributes {stable_mosaic.version = 11 : i64} {
  func.func @_dense_kernel(%arg0: i32, %arg1: memref<16x32xbf16, #tpu.memory_space<vmem>>, %arg2: memref<32x384xbf16, #tpu.memory_space<vmem>>, %arg3: memref<1x384xf32, #tpu.memory_space<vmem>>, %arg4: memref<16x384xbf16, #tpu.memory_space<vmem>>) attributes {dimension_semantics = [#tpu.dimension_semantics<parallel>], iteration_bounds = array<i64: 2>, scalar_prefetch = 0 : i64, scratch_operands = 0 : i64, tpu.core_type = #tpu.core_type<tc>, window_params = [{transform_indices = @transform_0, window_bounds = array<i64: 16, 32>}, {pipeline_mode = #tpu.pipeline_mode<synchronous>, transform_indices = @transform_1, window_bounds = array<i64: 32, 384>}, {pipeline_mode = #tpu.pipeline_mode<synchronous>, transform_indices = @transform_2, window_bounds = array<i64: 1, 384>}, {transform_indices = @transform_3, window_bounds = array<i64: 16, 384>}]} {
    %c0 = arith.constant 0 : index
    %c0_0 = arith.constant 0 : index
    %0 = vector.load %arg1[%c0, %c0_0] : memref<16x32xbf16, #tpu.memory_space<vmem>>, vector<16x32xbf16>
    %c0_1 = arith.constant 0 : index
    %c0_2 = arith.constant 0 : index
    %1 = vector.load %arg2[%c0_1, %c0_2] : memref<32x384xbf16, #tpu.memory_space<vmem>>, vector<32x384xbf16>
    %cst = arith.constant dense<0.000000e+00> : vector<16x384xf32>
    %2 = tpu.matmul %0, %1, %cst {dimension_numbers = #tpu.dot_dimension_numbers<[1], [0], [0], [1], [0, 0, 1, 1], [], []>} : vector<16x32xbf16>, vector<32x384xbf16>, vector<16x384xf32> -> vector<16x384xf32>
    %c0_3 = arith.constant 0 : index
    %c0_4 = arith.constant 0 : index
    %3 = vector.load %arg3[%c0_3, %c0_4] : memref<1x384xf32, #tpu.memory_space<vmem>>, vector<1x384xf32>
    %4 = vector.broadcast %3 : vector<1x384xf32> to vector<16x384xf32>
    %5 = arith.addf %2, %4 : vector<16x384xf32>
    %6 = arith.truncf %5 : vector<16x384xf32> to vector<16x384xbf16>
    %c0_5 = arith.constant 0 : index
    %c0_6 = arith.constant 0 : index
    %7 = vector.load %arg4[%c0_5, %c0_6] : memref<16x384xbf16, #tpu.memory_space<vmem>>, vector<16x384xbf16>
    tpu.vector_store %arg4[%c0_5, %c0_6], %6 {strides = array<i32>} : memref<16x384xbf16, #tpu.memory_space<vmem>>, vector<16x384xbf16>,
    return
  }
  func.func @transform_0(%arg0: i32) -> (i32, i32) {
    %c0_i32 = arith.constant 0 : i32
    %c0_i32_0 = arith.constant 0 : i32
    return %arg0, %c0_i32 : i32, i32
  }
  func.func @transform_1(%arg0: i32) -> (i32, i32) {
    %c0_i32 = arith.constant 0 : i32
    %c0_i32_0 = arith.constant 0 : i32
    %c0_i32_1 = arith.constant 0 : i32
    return %c0_i32, %c0_i32_0 : i32, i32
  }
  func.func @transform_2(%arg0: i32) -> (i32, i32) {
    %c0_i32 = arith.constant 0 : i32
    %c0_i32_0 = arith.constant 0 : i32
    %c0_i32_1 = arith.constant 0 : i32
    return %c0_i32, %c0_i32_0 : i32, i32
  }
  func.func @transform_3(%arg0: i32) -> (i32, i32) {
    %c0_i32 = arith.constant 0 : i32
    %c0_i32_0 = arith.constant 0 : i32
    return %arg0, %c0_i32 : i32, i32
  }
}

module attributes {stable_mosaic.version = 11 : i64} {
  func.func @_attention_kernel(%arg0: i32, %arg1: memref<1x16x64xbf16, #tpu.memory_space<vmem>>, %arg2: memref<1x16x64xbf16, #tpu.memory_space<vmem>>, %arg3: memref<1x16x64xbf16, #tpu.memory_space<vmem>>, %arg4: memref<1x1x16xf32, #tpu.memory_space<vmem>>, %arg5: memref<1x16x64xbf16, #tpu.memory_space<vmem>>) attributes {dimension_semantics = [#tpu.dimension_semantics<parallel>], iteration_bounds = array<i64: 4>, scalar_prefetch = 0 : i64, scratch_operands = 0 : i64, tpu.core_type = #tpu.core_type<tc>, window_params = [{transform_indices = @transform_0, window_bounds = array<i64: 1, 16, 64>}, {transform_indices = @transform_1, window_bounds = array<i64: 1, 16, 64>}, {transform_indices = @transform_2, window_bounds = array<i64: 1, 16, 64>}, {transform_indices = @transform_3, window_bounds = array<i64: 1, 1, 16>}, {transform_indices = @transform_4, window_bounds = array<i64: 1, 16, 64>}]} {
    %c0 = arith.constant 0 : index
    %c0_0 = arith.constant 0 : index
    %c0_1 = arith.constant 0 : index
    %0 = vector.load %arg1[%c0, %c0_0, %c0_1] : memref<1x16x64xbf16, #tpu.memory_space<vmem>>, vector<1x16x64xbf16>
    %1 = vector.shape_cast %0 : vector<1x16x64xbf16> to vector<16x64xbf16>
    %c0_2 = arith.constant 0 : index
    %c0_3 = arith.constant 0 : index
    %c0_4 = arith.constant 0 : index
    %2 = vector.load %arg2[%c0_2, %c0_3, %c0_4] : memref<1x16x64xbf16, #tpu.memory_space<vmem>>, vector<1x16x64xbf16>
    %3 = vector.shape_cast %2 : vector<1x16x64xbf16> to vector<16x64xbf16>
    %cst = arith.constant dense<0.000000e+00> : vector<16x16xf32>
    %4 = tpu.matmul %1, %3, %cst {dimension_numbers = #tpu.dot_dimension_numbers<[1], [1], [0], [0], [0, 0, 1, 0], [], []>} : vector<16x64xbf16>, vector<16x64xbf16>, vector<16x16xf32> -> vector<16x16xf32>
    %cst_5 = arith.constant 1.250000e-01 : f32
    %5 = vector.broadcast %cst_5 : f32 to vector<16x16xf32>
    %6 = arith.mulf %4, %5 : vector<16x16xf32>
    %c0_6 = arith.constant 0 : index
    %c0_7 = arith.constant 0 : index
    %c0_8 = arith.constant 0 : index
    %7 = vector.load %arg4[%c0_6, %c0_7, %c0_8] : memref<1x1x16xf32, #tpu.memory_space<vmem>>, vector<1x1x16xf32>
    %8 = vector.shape_cast %7 : vector<1x1x16xf32> to vector<1x16xf32>
    %9 = vector.broadcast %8 : vector<1x16xf32> to vector<16x16xf32>
    %10 = arith.addf %6, %9 : vector<16x16xf32>
    %cst_9 = arith.constant dense<0xFF800000> : vector<16xf32>
    %11 = vector.multi_reduction <maximumf>, %10, %cst_9 [1] : vector<16x16xf32> to vector<16xf32>
    %12 = vector.shape_cast %11 : vector<16xf32> to vector<16x1xf32>
    %13 = vector.broadcast %12 : vector<16x1xf32> to vector<16x16xf32>
    %14 = arith.subf %10, %13 : vector<16x16xf32>
    %15 = math.exp %14 : vector<16x16xf32>
    %cst_10 = arith.constant dense<0.000000e+00> : vector<16xf32>
    %16 = vector.multi_reduction <add>, %15, %cst_10 [1] : vector<16x16xf32> to vector<16xf32>
    %17 = vector.shape_cast %16 : vector<16xf32> to vector<16x1xf32>
    %18 = vector.broadcast %17 : vector<16x1xf32> to vector<16x16xf32>
    %19 = arith.divf %15, %18 : vector<16x16xf32>
    %20 = arith.truncf %19 : vector<16x16xf32> to vector<16x16xbf16>
    %c0_11 = arith.constant 0 : index
    %c0_12 = arith.constant 0 : index
    %c0_13 = arith.constant 0 : index
    %21 = vector.load %arg3[%c0_11, %c0_12, %c0_13] : memref<1x16x64xbf16, #tpu.memory_space<vmem>>, vector<1x16x64xbf16>
    %22 = vector.shape_cast %21 : vector<1x16x64xbf16> to vector<16x64xbf16>
    %cst_14 = arith.constant dense<0.000000e+00> : vector<16x64xf32>
    %23 = tpu.matmul %20, %22, %cst_14 {dimension_numbers = #tpu.dot_dimension_numbers<[1], [0], [0], [1], [0, 0, 1, 1], [], []>} : vector<16x16xbf16>, vector<16x64xbf16>, vector<16x64xf32> -> vector<16x64xf32>
    %24 = arith.truncf %23 : vector<16x64xf32> to vector<16x64xbf16>
    %c0_15 = arith.constant 0 : index
    %c0_16 = arith.constant 0 : index
    %c0_17 = arith.constant 0 : index
    %25 = vector.load %arg5[%c0_15, %c0_16, %c0_17] : memref<1x16x64xbf16, #tpu.memory_space<vmem>>, vector<1x16x64xbf16>
    %26 = vector.shape_cast %25 : vector<1x16x64xbf16> to vector<16x64xbf16>
    %27 = vector.shape_cast %24 : vector<16x64xbf16> to vector<1x16x64xbf16>
    tpu.vector_store %arg5[%c0_15, %c0_16, %c0_17], %27 {strides = array<i32>} : memref<1x16x64xbf16, #tpu.memory_space<vmem>>, vector<1x16x64xbf16>,
    return
  }
  func.func @transform_0(%arg0: i32) -> (i32, i32, i32) {
    %c0_i32 = arith.constant 0 : i32
    %c0_i32_0 = arith.constant 0 : i32
    %c0_i32_1 = arith.constant 0 : i32
    return %arg0, %c0_i32, %c0_i32_0 : i32, i32, i32
  }
  func.func @transform_1(%arg0: i32) -> (i32, i32, i32) {
    %c0_i32 = arith.constant 0 : i32
    %c0_i32_0 = arith.constant 0 : i32
    %c0_i32_1 = arith.constant 0 : i32
    return %arg0, %c0_i32, %c0_i32_0 : i32, i32, i32
  }
  func.func @transform_2(%arg0: i32) -> (i32, i32, i32) {
    %c0_i32 = arith.constant 0 : i32
    %c0_i32_0 = arith.constant 0 : i32
    %c0_i32_1 = arith.constant 0 : i32
    return %arg0, %c0_i32, %c0_i32_0 : i32, i32, i32
  }
  func.func @transform_3(%arg0: i32) -> (i32, i32, i32) {
    %c0_i32 = arith.constant 0 : i32
    %c0_i32_0 = arith.constant 0 : i32
    %c0_i32_1 = arith.constant 0 : i32
    return %arg0, %c0_i32, %c0_i32_0 : i32, i32, i32
  }
  func.func @transform_4(%arg0: i32) -> (i32, i32, i32) {
    %c0_i32 = arith.constant 0 : i32
    %c0_i32_0 = arith.constant 0 : i32
    %c0_i32_1 = arith.constant 0 : i32
    return %arg0, %c0_i32, %c0_i32_0 : i32, i32, i32
  }
}

module attributes {stable_mosaic.version = 11 : i64} {
  func.func @_dense_add_ln_kernel(%arg0: i32, %arg1: memref<16x128xbf16, #tpu.memory_space<vmem>>, %arg2: memref<128x32xbf16, #tpu.memory_space<vmem>>, %arg3: memref<1x32xf32, #tpu.memory_space<vmem>>, %arg4: memref<16x32xf32, #tpu.memory_space<vmem>>, %arg5: memref<1x32xf32, #tpu.memory_space<vmem>>, %arg6: memref<1x32xf32, #tpu.memory_space<vmem>>, %arg7: memref<16x32xf32, #tpu.memory_space<vmem>>) attributes {dimension_semantics = [#tpu.dimension_semantics<parallel>], iteration_bounds = array<i64: 2>, scalar_prefetch = 0 : i64, scratch_operands = 0 : i64, tpu.core_type = #tpu.core_type<tc>, window_params = [{transform_indices = @transform_0, window_bounds = array<i64: 16, 128>}, {pipeline_mode = #tpu.pipeline_mode<synchronous>, transform_indices = @transform_1, window_bounds = array<i64: 128, 32>}, {pipeline_mode = #tpu.pipeline_mode<synchronous>, transform_indices = @transform_2, window_bounds = array<i64: 1, 32>}, {transform_indices = @transform_3, window_bounds = array<i64: 16, 32>}, {pipeline_mode = #tpu.pipeline_mode<synchronous>, transform_indices = @transform_4, window_bounds = array<i64: 1, 32>}, {pipeline_mode = #tpu.pipeline_mode<synchronous>, transform_indices = @transform_5, window_bounds = array<i64: 1, 32>}, {transform_indices = @transform_6, window_bounds = array<i64: 16, 32>}]} {
    %c0 = arith.constant 0 : index
    %c0_0 = arith.constant 0 : index
    %0 = vector.load %arg1[%c0, %c0_0] : memref<16x128xbf16, #tpu.memory_space<vmem>>, vector<16x128xbf16>
    %c0_1 = arith.constant 0 : index
    %c0_2 = arith.constant 0 : index
    %1 = vector.load %arg2[%c0_1, %c0_2] : memref<128x32xbf16, #tpu.memory_space<vmem>>, vector<128x32xbf16>
    %cst = arith.constant dense<0.000000e+00> : vector<16x32xf32>
    %2 = tpu.matmul %0, %1, %cst {dimension_numbers = #tpu.dot_dimension_numbers<[1], [0], [0], [1], [0, 0, 1, 1], [], []>} : vector<16x128xbf16>, vector<128x32xbf16>, vector<16x32xf32> -> vector<16x32xf32>
    %c0_3 = arith.constant 0 : index
    %c0_4 = arith.constant 0 : index
    %3 = vector.load %arg3[%c0_3, %c0_4] : memref<1x32xf32, #tpu.memory_space<vmem>>, vector<1x32xf32>
    %4 = vector.broadcast %3 : vector<1x32xf32> to vector<16x32xf32>
    %5 = arith.addf %2, %4 : vector<16x32xf32>
    %c0_5 = arith.constant 0 : index
    %c0_6 = arith.constant 0 : index
    %6 = vector.load %arg4[%c0_5, %c0_6] : memref<16x32xf32, #tpu.memory_space<vmem>>, vector<16x32xf32>
    %7 = arith.addf %5, %6 : vector<16x32xf32>
    %cst_7 = arith.constant dense<0.000000e+00> : vector<16xf32>
    %8 = vector.multi_reduction <add>, %7, %cst_7 [1] : vector<16x32xf32> to vector<16xf32>
    %9 = vector.shape_cast %8 : vector<16xf32> to vector<16x1xf32>
    %cst_8 = arith.constant 3.200000e+01 : f32
    %10 = vector.broadcast %cst_8 : f32 to vector<16x1xf32>
    %11 = arith.divf %9, %10 : vector<16x1xf32>
    %12 = vector.broadcast %11 : vector<16x1xf32> to vector<16x32xf32>
    %13 = arith.subf %7, %12 : vector<16x32xf32>
    %14 = arith.mulf %13, %13 : vector<16x32xf32>
    %cst_9 = arith.constant dense<0.000000e+00> : vector<16xf32>
    %15 = vector.multi_reduction <add>, %14, %cst_9 [1] : vector<16x32xf32> to vector<16xf32>
    %16 = vector.shape_cast %15 : vector<16xf32> to vector<16x1xf32>
    %cst_10 = arith.constant 3.200000e+01 : f32
    %17 = vector.broadcast %cst_10 : f32 to vector<16x1xf32>
    %18 = arith.divf %16, %17 : vector<16x1xf32>
    %cst_11 = arith.constant 9.99999996E-13 : f32
    %19 = vector.broadcast %cst_11 : f32 to vector<16x1xf32>
    %20 = arith.addf %18, %19 : vector<16x1xf32>
    %21 = math.rsqrt %20 : vector<16x1xf32>
    %22 = vector.broadcast %21 : vector<16x1xf32> to vector<16x32xf32>
    %23 = arith.mulf %13, %22 : vector<16x32xf32>
    %c0_12 = arith.constant 0 : index
    %c0_13 = arith.constant 0 : index
    %24 = vector.load %arg5[%c0_12, %c0_13] : memref<1x32xf32, #tpu.memory_space<vmem>>, vector<1x32xf32>
    %25 = vector.broadcast %24 : vector<1x32xf32> to vector<16x32xf32>
    %26 = arith.mulf %23, %25 : vector<16x32xf32>
    %c0_14 = arith.constant 0 : index
    %c0_15 = arith.constant 0 : index
    %27 = vector.load %arg6[%c0_14, %c0_15] : memref<1x32xf32, #tpu.memory_space<vmem>>, vector<1x32xf32>
    %28 = vector.broadcast %27 : vector<1x32xf32> to vector<16x32xf32>
    %29 = arith.addf %26, %28 : vector<16x32xf32>
    %c0_16 = arith.constant 0 : index
    %c0_17 = arith.constant 0 : index
    %30 = vector.load %arg7[%c0_16, %c0_17] : memref<16x32xf32, #tpu.memory_space<vmem>>, vector<16x32xf32>
    tpu.vector_store %arg7[%c0_16, %c0_17], %29 {strides = array<i32>} : memref<16x32xf32, #tpu.memory_space<vmem>>, vector<16x32xf32>,
    return
  }
  func.func @transform_0(%arg0: i32) -> (i32, i32) {
    %c0_i32 = arith.constant 0 : i32
    %c0_i32_0 = arith.constant 0 : i32
    return %arg0, %c0_i32 : i32, i32
  }
  func.func @transform_1(%arg0: i32) -> (i32, i32) {
    %c0_i32 = arith.constant 0 : i32
    %c0_i32_0 = arith.constant 0 : i32
    %c0_i32_1 = arith.constant 0 : i32
    return %c0_i32, %c0_i32_0 : i32, i32
  }
  func.func @transform_2(%arg0: i32) -> (i32, i32) {
    %c0_i32 = arith.constant 0 : i32
    %c0_i32_0 = arith.constant 0 : i32
    %c0_i32_1 = arith.constant 0 : i32
    return %c0_i32, %c0_i32_0 : i32, i32
  }
  func.func @transform_3(%arg0: i32) -> (i32, i32) {
    %c0_i32 = arith.constant 0 : i32
    %c0_i32_0 = arith.constant 0 : i32
    return %arg0, %c0_i32 : i32, i32
  }
  func.func @transform_4(%arg0: i32) -> (i32, i32) {
    %c0_i32 = arith.constant 0 : i32
    %c0_i32_0 = arith.constant 0 : i32
    %c0_i32_1 = arith.constant 0 : i32
    return %c0_i32, %c0_i32_0 : i32, i32
  }
  func.func @transform_5(%arg0: i32) -> (i32, i32) {
    %c0_i32 = arith.constant 0 : i32
    %c0_i32_0 = arith.constant 0 : i32
    %c0_i32_1 = arith.constant 0 : i32
    return %c0_i32, %c0_i32_0 : i32, i32
  }
  func.func @transform_6(%arg0: i32) -> (i32, i32) {
    %c0_i32 = arith.constant 0 : i32
    %c0_i32_0 = arith.constant 0 : i32
    return %arg0, %c0_i32 : i32, i32
  }
}

module attributes {stable_mosaic.version = 11 : i64} {
  func.func @_dense_kernel(%arg0: i32, %arg1: memref<16x32xbf16, #tpu.memory_space<vmem>>, %arg2: memref<32x128xbf16, #tpu.memory_space<vmem>>, %arg3: memref<1x128xf32, #tpu.memory_space<vmem>>, %arg4: memref<16x128xbf16, #tpu.memory_space<vmem>>) attributes {dimension_semantics = [#tpu.dimension_semantics<parallel>], iteration_bounds = array<i64: 2>, scalar_prefetch = 0 : i64, scratch_operands = 0 : i64, tpu.core_type = #tpu.core_type<tc>, window_params = [{transform_indices = @transform_0, window_bounds = array<i64: 16, 32>}, {pipeline_mode = #tpu.pipeline_mode<synchronous>, transform_indices = @transform_1, window_bounds = array<i64: 32, 128>}, {pipeline_mode = #tpu.pipeline_mode<synchronous>, transform_indices = @transform_2, window_bounds = array<i64: 1, 128>}, {transform_indices = @transform_3, window_bounds = array<i64: 16, 128>}]} {
    %c0 = arith.constant 0 : index
    %c0_0 = arith.constant 0 : index
    %0 = vector.load %arg1[%c0, %c0_0] : memref<16x32xbf16, #tpu.memory_space<vmem>>, vector<16x32xbf16>
    %c0_1 = arith.constant 0 : index
    %c0_2 = arith.constant 0 : index
    %1 = vector.load %arg2[%c0_1, %c0_2] : memref<32x128xbf16, #tpu.memory_space<vmem>>, vector<32x128xbf16>
    %cst = arith.constant dense<0.000000e+00> : vector<16x128xf32>
    %2 = tpu.matmul %0, %1, %cst {dimension_numbers = #tpu.dot_dimension_numbers<[1], [0], [0], [1], [0, 0, 1, 1], [], []>} : vector<16x32xbf16>, vector<32x128xbf16>, vector<16x128xf32> -> vector<16x128xf32>
    %c0_3 = arith.constant 0 : index
    %c0_4 = arith.constant 0 : index
    %3 = vector.load %arg3[%c0_3, %c0_4] : memref<1x128xf32, #tpu.memory_space<vmem>>, vector<1x128xf32>
    %4 = vector.broadcast %3 : vector<1x128xf32> to vector<16x128xf32>
    %5 = arith.addf %2, %4 : vector<16x128xf32>
    %cst_5 = arith.constant 5.000000e-01 : f32
    %6 = vector.broadcast %cst_5 : f32 to vector<16x128xf32>
    %7 = arith.mulf %6, %5 : vector<16x128xf32>
    %cst_6 = arith.constant 0.707106769 : f32
    %8 = vector.broadcast %cst_6 : f32 to vector<16x128xf32>
    %9 = arith.mulf %5, %8 : vector<16x128xf32>
    %10 = math.erf %9 : vector<16x128xf32>
    %cst_7 = arith.constant 1.000000e+00 : f32
    %11 = vector.broadcast %cst_7 : f32 to vector<16x128xf32>
    %12 = arith.addf %11, %10 : vector<16x128xf32>
    %13 = arith.mulf %7, %12 : vector<16x128xf32>
    %14 = arith.truncf %13 : vector<16x128xf32> to vector<16x128xbf16>
    %c0_8 = arith.constant 0 : index
    %c0_9 = arith.constant 0 : index
    %15 = vector.load %arg4[%c0_8, %c0_9] : memref<16x128xbf16, #tpu.memory_space<vmem>>, vector<16x128xbf16>
    tpu.vector_store %arg4[%c0_8, %c0_9], %14 {strides = array<i32>} : memref<16x128xbf16, #tpu.memory_space<vmem>>, vector<16x128xbf16>,
    return
  }
  func.func @transform_0(%arg0: i32) -> (i32, i32) {
    %c0_i32 = arith.constant 0 : i32
    %c0_i32_0 = arith.constant 0 : i32
    return %arg0, %c0_i32 : i32, i32
  }
  func.func @transform_1(%arg0: i32) -> (i32, i32) {
    %c0_i32 = arith.constant 0 : i32
    %c0_i32_0 = arith.constant 0 : i32
    %c0_i32_1 = arith.constant 0 : i32
    return %c0_i32, %c0_i32_0 : i32, i32
  }
  func.func @transform_2(%arg0: i32) -> (i32, i32) {
    %c0_i32 = arith.constant 0 : i32
    %c0_i32_0 = arith.constant 0 : i32
    %c0_i32_1 = arith.constant 0 : i32
    return %c0_i32, %c0_i32_0 : i32, i32
  }
  func.func @transform_3(%arg0: i32) -> (i32, i32) {
    %c0_i32 = arith.constant 0 : i32
    %c0_i32_0 = arith.constant 0 : i32
    return %arg0, %c0_i32 : i32, i32
  }
}

module attributes {stable_mosaic.version = 11 : i64} {
  func.func @_dense_add_ln_kernel(%arg0: i32, %arg1: memref<16x128xbf16, #tpu.memory_space<vmem>>, %arg2: memref<128x32xbf16, #tpu.memory_space<vmem>>, %arg3: memref<1x32xf32, #tpu.memory_space<vmem>>, %arg4: memref<16x32xf32, #tpu.memory_space<vmem>>, %arg5: memref<1x32xf32, #tpu.memory_space<vmem>>, %arg6: memref<1x32xf32, #tpu.memory_space<vmem>>, %arg7: memref<16x32xf32, #tpu.memory_space<vmem>>) attributes {dimension_semantics = [#tpu.dimension_semantics<parallel>], iteration_bounds = array<i64: 2>, scalar_prefetch = 0 : i64, scratch_operands = 0 : i64, tpu.core_type = #tpu.core_type<tc>, window_params = [{transform_indices = @transform_0, window_bounds = array<i64: 16, 128>}, {pipeline_mode = #tpu.pipeline_mode<synchronous>, transform_indices = @transform_1, window_bounds = array<i64: 128, 32>}, {pipeline_mode = #tpu.pipeline_mode<synchronous>, transform_indices = @transform_2, window_bounds = array<i64: 1, 32>}, {transform_indices = @transform_3, window_bounds = array<i64: 16, 32>}, {pipeline_mode = #tpu.pipeline_mode<synchronous>, transform_indices = @transform_4, window_bounds = array<i64: 1, 32>}, {pipeline_mode = #tpu.pipeline_mode<synchronous>, transform_indices = @transform_5, window_bounds = array<i64: 1, 32>}, {transform_indices = @transform_6, window_bounds = array<i64: 16, 32>}]} {
    %c0 = arith.constant 0 : index
    %c0_0 = arith.constant 0 : index
    %0 = vector.load %arg1[%c0, %c0_0] : memref<16x128xbf16, #tpu.memory_space<vmem>>, vector<16x128xbf16>
    %c0_1 = arith.constant 0 : index
    %c0_2 = arith.constant 0 : index
    %1 = vector.load %arg2[%c0_1, %c0_2] : memref<128x32xbf16, #tpu.memory_space<vmem>>, vector<128x32xbf16>
    %cst = arith.constant dense<0.000000e+00> : vector<16x32xf32>
    %2 = tpu.matmul %0, %1, %cst {dimension_numbers = #tpu.dot_dimension_numbers<[1], [0], [0], [1], [0, 0, 1, 1], [], []>} : vector<16x128xbf16>, vector<128x32xbf16>, vector<16x32xf32> -> vector<16x32xf32>
    %c0_3 = arith.constant 0 : index
    %c0_4 = arith.constant 0 : index
    %3 = vector.load %arg3[%c0_3, %c0_4] : memref<1x32xf32, #tpu.memory_space<vmem>>, vector<1x32xf32>
    %4 = vector.broadcast %3 : vector<1x32xf32> to vector<16x32xf32>
    %5 = arith.addf %2, %4 : vector<16x32xf32>
    %c0_5 = arith.constant 0 : index
    %c0_6 = arith.constant 0 : index
    %6 = vector.load %arg4[%c0_5, %c0_6] : memref<16x32xf32, #tpu.memory_space<vmem>>, vector<16x32xf32>
    %7 = arith.addf %5, %6 : vector<16x32xf32>
    %cst_7 = arith.constant dense<0.000000e+00> : vector<16xf32>
    %8 = vector.multi_reduction <add>, %7, %cst_7 [1] : vector<16x32xf32> to vector<16xf32>
    %9 = vector.shape_cast %8 : vector<16xf32> to vector<16x1xf32>
    %cst_8 = arith.constant 3.200000e+01 : f32
    %10 = vector.broadcast %cst_8 : f32 to vector<16x1xf32>
    %11 = arith.divf %9, %10 : vector<16x1xf32>
    %12 = vector.broadcast %11 : vector<16x1xf32> to vector<16x32xf32>
    %13 = arith.subf %7, %12 : vector<16x32xf32>
    %14 = arith.mulf %13, %13 : vector<16x32xf32>
    %cst_9 = arith.constant dense<0.000000e+00> : vector<16xf32>
    %15 = vector.multi_reduction <add>, %14, %cst_9 [1] : vector<16x32xf32> to vector<16xf32>
    %16 = vector.shape_cast %15 : vector<16xf32> to vector<16x1xf32>
    %cst_10 = arith.constant 3.200000e+01 : f32
    %17 = vector.broadcast %cst_10 : f32 to vector<16x1xf32>
    %18 = arith.divf %16, %17 : vector<16x1xf32>
    %cst_11 = arith.constant 9.99999996E-13 : f32
    %19 = vector.broadcast %cst_11 : f32 to vector<16x1xf32>
    %20 = arith.addf %18, %19 : vector<16x1xf32>
    %21 = math.rsqrt %20 : vector<16x1xf32>
    %22 = vector.broadcast %21 : vector<16x1xf32> to vector<16x32xf32>
    %23 = arith.mulf %13, %22 : vector<16x32xf32>
    %c0_12 = arith.constant 0 : index
    %c0_13 = arith.constant 0 : index
    %24 = vector.load %arg5[%c0_12, %c0_13] : memref<1x32xf32, #tpu.memory_space<vmem>>, vector<1x32xf32>
    %25 = vector.broadcast %24 : vector<1x32xf32> to vector<16x32xf32>
    %26 = arith.mulf %23, %25 : vector<16x32xf32>
    %c0_14 = arith.constant 0 : index
    %c0_15 = arith.constant 0 : index
    %27 = vector.load %arg6[%c0_14, %c0_15] : memref<1x32xf32, #tpu.memory_space<vmem>>, vector<1x32xf32>
    %28 = vector.broadcast %27 : vector<1x32xf32> to vector<16x32xf32>
    %29 = arith.addf %26, %28 : vector<16x32xf32>
    %c0_16 = arith.constant 0 : index
    %c0_17 = arith.constant 0 : index
    %30 = vector.load %arg7[%c0_16, %c0_17] : memref<16x32xf32, #tpu.memory_space<vmem>>, vector<16x32xf32>
    tpu.vector_store %arg7[%c0_16, %c0_17], %29 {strides = array<i32>} : memref<16x32xf32, #tpu.memory_space<vmem>>, vector<16x32xf32>,
    return
  }
  func.func @transform_0(%arg0: i32) -> (i32, i32) {
    %c0_i32 = arith.constant 0 : i32
    %c0_i32_0 = arith.constant 0 : i32
    return %arg0, %c0_i32 : i32, i32
  }
  func.func @transform_1(%arg0: i32) -> (i32, i32) {
    %c0_i32 = arith.constant 0 : i32
    %c0_i32_0 = arith.constant 0 : i32
    %c0_i32_1 = arith.constant 0 : i32
    return %c0_i32, %c0_i32_0 : i32, i32
  }
  func.func @transform_2(%arg0: i32) -> (i32, i32) {
    %c0_i32 = arith.constant 0 : i32
    %c0_i32_0 = arith.constant 0 : i32
    %c0_i32_1 = arith.constant 0 : i32
    return %c0_i32, %c0_i32_0 : i32, i32
  }
  func.func @transform_3(%arg0: i32) -> (i32, i32) {
    %c0_i32 = arith.constant 0 : i32
    %c0_i32_0 = arith.constant 0 : i32
    return %arg0, %c0_i32 : i32, i32
  }
  func.func @transform_4(%arg0: i32) -> (i32, i32) {
    %c0_i32 = arith.constant 0 : i32
    %c0_i32_0 = arith.constant 0 : i32
    %c0_i32_1 = arith.constant 0 : i32
    return %c0_i32, %c0_i32_0 : i32, i32
  }
  func.func @transform_5(%arg0: i32) -> (i32, i32) {
    %c0_i32 = arith.constant 0 : i32
    %c0_i32_0 = arith.constant 0 : i32
    %c0_i32_1 = arith.constant 0 : i32
    return %c0_i32, %c0_i32_0 : i32, i32
  }
  func.func @transform_6(%arg0: i32) -> (i32, i32) {
    %c0_i32 = arith.constant 0 : i32
    %c0_i32_0 = arith.constant 0 : i32
    return %arg0, %c0_i32 : i32, i32
  }
}

</mosaic_0001>

<llo_original>
// kernel: bert_layer_forward.5
$region0: #{bert_layer_forward.5}
  #allocation0 [shape = 'u32[]', space=smem, size = 0x4, offset = 0x4, fixed_abs, tag = 'smem constant byte address 0x4 - core index']
  #allocation1 [shape = 'u32[144,128]{1,0:T(1,128)}', space=vmem, size = 0x12000, scoped, tag = 'internal scratch']
  %s0 = inlined_call_operand.vmem [shape: bf16[32,32], index: 0, kind: input, shape index: {}]
  %s1 = inlined_call_operand.vmem [shape: bf16[32,384], index: 1, kind: input, shape index: {}]
  %s2 = inlined_call_operand.vmem [shape: f32[1,384], index: 2, kind: input, shape index: {}]
  %s3 = inlined_call_operand.vmem [shape: bf16[32,384], index: 3, kind: output, shape index: {}]
  %s4 = sld [smem:[#allocation0]]
  $region45: #{bert_layer_forward.5} parent=0
    _
  %s6 = ssub.s32 1, %s4
  %s7 = scalar_select 0, %s6, %s4
  loop: start=0, step=1, limit=4
  $region2: #{bert_layer_forward.5} parent=0 // loop_pre_header
    _
  $region3: #{bert_layer_forward.5} parent=0 // loop_header
    %s9 = sphi 0, %s13
    %p10 = scmp.ge.s32.totalorder %s9, 4
    %s19 = sphi 0, %s21
    %s22 = sphi 0, %s19
    %s23 = sphi 0, %s22
    %s39 = sphi 0, %s23
    %s43 = sphi 0, %s43
    %s45 = sphi 0, %s43
    %s46 = sphi 0, %s45
    %s60 = sphi 0, %s46
    %s64 = sphi 0, %s64
    %s66 = sphi 0, %s64
    %s67 = sphi 0, %s66
    %s81 = sphi 0, %s67
    %s87 = sphi 0, %s89
    %s90 = sphi 0, %s87
    %s91 = sphi 0, %s90
    %s107 = sphi 0, %s91
  $region4: #{bert_layer_forward.5} parent=0 // loop_header_branch
    %12 = sbr.rel (%p10) target = $region8
  $region5: #{bert_layer_forward.5} parent=0 // loop_body
    %s14 = ssub.s32 %s9, 1
    %s15 = ssub.s32 %s9, 2
    %s16 = sadd.s32 %s9, 1
    %s17 = ssub.s32 %s9, %s16
    %p18 = scmp.eq.s32.totalorder %s17, 0
    %s20 = sadd.s32 %s19, 1
    %s21 = scalar_select %p18, %s19, %s20
    %p24 = pneg %p18
    %p25 = scmp.eq.s32.totalorder %s9, 1
    %p26 = por %p24, %p25
    %p27 = scmp.ne.s32.totalorder %s19, %s22
    %p28 = scmp.eq.s32.totalorder %s9, 0
    %p29 = por %p27, %p28
    %p30 = scmp.ne.s32.totalorder %s19, %s22
    %p31 = scmp.eq.s32.totalorder %s14, 1
    %p32 = por %p30, %p31
    %p33 = scmp.ne.s32.totalorder %s22, %s23
    %p34 = scmp.eq.s32.totalorder %s14, 0
    %p35 = por %p33, %p34
    %p36 = scmp.ne.s32.totalorder %s22, %s23
    %p37 = scmp.eq.s32.totalorder %s15, 1
    %p38 = por %p36, %p37
    %p40 = scmp.ne.s32.totalorder %s23, %s39
    %p41 = scmp.eq.s32.totalorder %s15, 0
    %p42 = por %p40, %p41
    %s44 = sadd.s32 %s43, 1
    %p47 = scmp.eq.s32.totalorder %s9, 1
    %p48 = scmp.ne.s32.totalorder %s43, %s45
    %p49 = scmp.eq.s32.totalorder %s9, 0
    %p50 = por %p48, %p49
    %p51 = scmp.ne.s32.totalorder %s43, %s45
    %p52 = scmp.eq.s32.totalorder %s14, 1
    %p53 = por %p51, %p52
    %p54 = scmp.ne.s32.totalorder %s45, %s46
    %p55 = scmp.eq.s32.totalorder %s14, 0
    %p56 = por %p54, %p55
    %p57 = scmp.ne.s32.totalorder %s45, %s46
    %p58 = scmp.eq.s32.totalorder %s15, 1
    %p59 = por %p57, %p58
    %p61 = scmp.ne.s32.totalorder %s46, %s60
    %p62 = scmp.eq.s32.totalorder %s15, 0
    %p63 = por %p61, %p62
    %s65 = sadd.s32 %s64, 1
    %p68 = scmp.eq.s32.totalorder %s9, 1
    %p69 = scmp.ne.s32.totalorder %s64, %s66
    %p70 = scmp.eq.s32.totalorder %s9, 0
    %p71 = por %p69, %p70
    %p72 = scmp.ne.s32.totalorder %s64, %s66
    %p73 = scmp.eq.s32.totalorder %s14, 1
    %p74 = por %p72, %p73
    %p75 = scmp.ne.s32.totalorder %s66, %s67
    %p76 = scmp.eq.s32.totalorder %s14, 0
    %p77 = por %p75, %p76
    %p78 = scmp.ne.s32.totalorder %s66, %s67
    %p79 = scmp.eq.s32.totalorder %s15, 1
    %p80 = por %p78, %p79
    %p82 = scmp.ne.s32.totalorder %s67, %s81
    %p83 = scmp.eq.s32.totalorder %s15, 0
    %p84 = por %p82, %p83
    %s85 = ssub.s32 %s9, %s16
    %p86 = scmp.eq.s32.totalorder %s85, 0
    %s88 = sadd.s32 %s87, 1
    %s89 = scalar_select %p86, %s87, %s88
    %p92 = pneg %p86
    %p93 = scmp.eq.s32.totalorder %s9, 1
    %p94 = por %p92, %p93
    %p95 = scmp.ne.s32.totalorder %s87, %s90
    %p96 = scmp.eq.s32.totalorder %s9, 0
    %p97 = por %p95, %p96
    %p98 = scmp.ne.s32.totalorder %s87, %s90
    %p99 = scmp.eq.s32.totalorder %s14, 1
    %p100 = por %p98, %p99
    %p101 = scmp.ne.s32.totalorder %s90, %s91
    %p102 = scmp.eq.s32.totalorder %s14, 0
    %p103 = por %p101, %p102
    %p104 = scmp.ne.s32.totalorder %s90, %s91
    %p105 = scmp.eq.s32.totalorder %s15, 1
    %p106 = por %p104, %p105
    %p108 = scmp.ne.s32.totalorder %s91, %s107
    %p109 = scmp.eq.s32.totalorder %s15, 0
    %p110 = por %p108, %p109
    %p111 = scmp.le.s32.totalorder 1, %s9
    %p112 = scmp.lt.s32.totalorder %s9, 3
    %p113 = pnand %p111, %p112
    %p114 = pneg %p113
    // Predicated region
    $region9: #{bert_layer_forward.5} parent=5 // pred_check
      _
    $region10: #{bert_layer_forward.5} parent=5 // pred_check_branch
      %116 = sbr.rel (%p113) target = $region12
    $region11: #{bert_layer_forward.5} parent=5 // pred_region
      %s117 = ssub.s32 %s9, 1
      // Predicated region
      $region13: #{bert_layer_forward.5} parent=11 // pred_check
        %p118 = pneg %p56
      $region14: #{bert_layer_forward.5} parent=11 // pred_check_branch
        %120 = sbr.rel (%p118) target = $region16
      $region15: #{bert_layer_forward.5} parent=11 // pred_region
        _
      $region16: #{bert_layer_forward.5} parent=11 // pred_fallthru
        _
      // Predicated region
      $region17: #{bert_layer_forward.5} parent=11 // pred_check
        %p121 = pneg %p77
      $region18: #{bert_layer_forward.5} parent=11 // pred_check_branch
        %123 = sbr.rel (%p121) target = $region20
      $region19: #{bert_layer_forward.5} parent=11 // pred_region
        _
      $region20: #{bert_layer_forward.5} parent=11 // pred_fallthru
        _
    $region12: #{bert_layer_forward.5} parent=5 // pred_fallthru
      _
    %p124 = scmp.lt.s32.totalorder %s9, 2
    // Predicated region
    $region21: #{bert_layer_forward.5} parent=5 // pred_check
      %p125 = pneg %p124
    $region22: #{bert_layer_forward.5} parent=5 // pred_check_branch
      %127 = sbr.rel (%p125) target = $region24
    $region23: #{bert_layer_forward.5} parent=5 // pred_region
      // Predicated region
      $region25: #{bert_layer_forward.5} parent=23 // pred_check
        %p128 = pneg %p29
      $region26: #{bert_layer_forward.5} parent=23 // pred_check_branch
        %130 = sbr.rel (%p128) target = $region28
      $region27: #{bert_layer_forward.5} parent=23 // pred_region
        %s131 = smul.u32 2, %s9
        %p132 = scmp.lt.s32.totalorder %s131, 3
        %s133 = scalar_select %p132, %s131, 3
        %s134 = smul.addr %s133, 4
        %s135 = scalar_lea.vmem %s0, %s134
        %s136 = smul.u32 2, %s9
      $region28: #{bert_layer_forward.5} parent=23 // pred_fallthru
        _
    $region24: #{bert_layer_forward.5} parent=5 // pred_fallthru
      _
    %p137 = scmp.le.s32.totalorder 1, %s9
    %p138 = scmp.lt.s32.totalorder %s9, 3
    %p139 = pnand %p137, %p138
    %p140 = pneg %p139
    // Predicated region
    $region29: #{bert_layer_forward.5} parent=5 // pred_check
      _
    $region30: #{bert_layer_forward.5} parent=5 // pred_check_branch
      %142 = sbr.rel (%p139) target = $region32
    $region31: #{bert_layer_forward.5} parent=5 // pred_region
      %s143 = ssub.s32 %s9, 1
      %s144 = smul.u32 2, %s14
      %p145 = scmp.lt.s32.totalorder %s144, 3
      %s146 = scalar_select %p145, %s144, 3
      %s147 = smul.addr %s146, 4
      %s148 = scalar_lea.vmem %s0, %s147
      %p149 = pneg %p35
      %p150 = pneg %p32
      %p151 = pneg %p56
      %p152 = pneg %p53
      %p153 = pneg %p77
      %p154 = pneg %p74
      %p155 = pneg %p103
      %p156 = pneg %p100
      %s157 = smul.u32 2, %s14
      %p158 = scmp.lt.s32.totalorder %s157, 3
      %s159 = scalar_select %p158, %s157, 3
      %s160 = smul.addr %s159, 3
      %s161 = smul.addr %s160, 4
      %s162 = scalar_lea.vmem %s3, %s161
      %s163 = smul.u32 2, %s14
      %p164 = scmp.lt.s32.totalorder %s163, 3
      %s165 = scalar_select %p164, %s163, 3
      %s166 = smul.addr %s165, 4
      %s167 = scalar_lea.vmem %s0, %s166
      %s168 = smul.u32 2, %s14
      %s169 = smul.u32 2, %s14
      %p170 = scmp.lt.s32.totalorder %s169, 3
      %s171 = scalar_select %p170, %s169, 3
      %s172 = smul.addr %s171, 3
      %s173 = smul.addr %s172, 4
      %s174 = scalar_lea.vmem %s3, %s173
      %s175 = smul.u32 2, %s14
      %v177 = vld [vmem:[%s167] sm:$0xf]
      %v178 = vld [vmem:[%s167 + $0x4] sm:$0xf]
      %v179 = vld [vmem:[%s1] sm:$0xff]
      %v180 = vld [vmem:[%s1 + $0x8] sm:$0xf]
      %v181 = vld [vmem:[%s1 + $0xc] sm:$0xff]
      %v182 = vld [vmem:[%s1 + $0x14] sm:$0xf]
      %v183 = vld [vmem:[%s1 + $0x18] sm:$0xff]
      %v184 = vld [vmem:[%s1 + $0x20] sm:$0xf]
      %v185 = vld [vmem:[%s1 + $0x24] sm:$0xff]
      %v186 = vld [vmem:[%s1 + $0x2c] sm:$0xf]
      %v187 = vld [vmem:[%s2] sm:$0x7]
      %v189 = vlaneseq
      %v190 = vshrl.u32 %v189, 7
      %v191 = vsub.s32 0, %v190
      %v192 = vrot.slane %v187, %v191
      %v193 = vlaneseq
      %v194 = vshrl.u32 %v193, 7
      %v195 = vsub.s32 1, %v194
      %v196 = vrot.slane %v187, %v195
      %v197 = vlaneseq
      %v198 = vshrl.u32 %v197, 7
      %v199 = vsub.s32 2, %v198
      %v200 = vrot.slane %v187, %v199
      %v206 = vunpack.c.l.b16 %v177
      %v207 = vunpack.c.l.b16 %v178
      %v208 = vpack.c.b16 %v207, %v206
      %v217 = vunpack.c.l.b16 %v179
      %v218 = vunpack.c.h.b16 %v179
      %v219 = vunpack.c.l.b16 %v180
      %v220 = vunpack.c.l.b16 %v181
      %v221 = vunpack.c.h.b16 %v181
      %v222 = vunpack.c.l.b16 %v182
      %v223 = vunpack.c.l.b16 %v183
      %v224 = vunpack.c.h.b16 %v183
      %v225 = vunpack.c.l.b16 %v184
      %v226 = vunpack.c.l.b16 %v185
      %v227 = vunpack.c.h.b16 %v185
      %v228 = vunpack.c.l.b16 %v186
      %v229 = vpack.c.b16 %v220, %v217
      %v230 = vpack.c.b16 %v221, %v218
      %v231 = vpack.c.b16 %v222, %v219
      %v232 = vpack.c.b16 %v226, %v223
      %v233 = vpack.c.b16 %v227, %v224
      %v234 = vpack.c.b16 %v228, %v225
      %vm241 = vcmask 261120
      %v243 = vsel %vm241, %v208, 0
      %245 = vmatprep.subr.bf16.mxu0 %v230
      %246 = vmatpush1.bf16.msra.mxu0 %v229
      %247 = vmatprep.subr.bf16.mxu0 %v233
      %248 = vmatpush1.bf16.msra.mxu0 %v232
      %249 = vmatprep.subr.bf16.mxu0 0
      %250 = vmatpush1.bf16.msra.mxu0 0
      %251 = vmatprep.subr.bf16.mxu0 0
      %252 = vmatpush1.bf16.msra.mxu0 0
      %253 = vmatprep.subr.bf16.mxu0 0
      %254 = vmatpush1.bf16.msra.mxu0 0
      %255 = vmatprep.subr.bf16.mxu0 0
      %256 = vmatpush1.bf16.msra.mxu0 0
      %257 = vmatprep.subr.bf16.mxu0 0
      %258 = vmatpush1.bf16.msra.mxu0 0
      %259 = vmatprep.subr.bf16.mxu0 0
      %260 = vmatpush1.bf16.msra.mxu0 0
      %261 = vmatprep.subr.bf16.mxu0 0
      %262 = vmatpush1.bf16.msra.mxu0 0
      %263 = vmatprep.subr.bf16.mxu0 0
      %264 = vmatpush1.bf16.msra.mxu0 0
      %265 = vmatprep.subr.bf16.mxu0 0
      %266 = vmatpush1.bf16.msra.mxu0 0
      %267 = vmatprep.subr.bf16.mxu0 0
      %268 = vmatpush1.bf16.msra.mxu0 0
      %269 = vmatprep.subr.bf16.mxu0 0
      %270 = vmatpush1.bf16.msra.mxu0 0
      %271 = vmatprep.subr.bf16.mxu0 0
      %272 = vmatpush1.bf16.msra.mxu0 0
      %273 = vmatprep.subr.bf16.mxu0 0
      %274 = vmatpush1.bf16.msra.mxu0 0
      %275 = vmatprep.subr.bf16.mxu0 0
      %276 = vmatpush1.bf16.msra.mxu0 0
      %277 = vmatprep.mubr.bf16.mxu0 0
      %278 = vmatmul.mubr.bf16.gmra.mrb[0].mxu0 %v243
      %v279 = vpop.f32.mrb[0].mxu0
      %v280 = vadd.f32 %v192, %v279
      %v281 = vpop.f32.mrb[0].mxu0
      %v282 = vadd.f32 %v196, %v281
      %v283 = vpop.f32.mrb[0].mxu0
      %v284 = vadd.f32 %v192, %v283
      %v285 = vpop.f32.mrb[0].mxu0
      %v286 = vadd.f32 %v196, %v285
      %287 = vdwg.mxu0
      %288 = vmatprep.subr.bf16.mxu0 0
      %289 = vmatpush1.bf16.msra.mxu0 %v231
      %290 = vmatprep.subr.bf16.mxu0 0
      %291 = vmatpush1.bf16.msra.mxu0 %v234
      %292 = vmatprep.subr.bf16.mxu0 0
      %293 = vmatpush1.bf16.msra.mxu0 0
      %294 = vmatprep.subr.bf16.mxu0 0
      %295 = vmatpush1.bf16.msra.mxu0 0
      %296 = vmatprep.subr.bf16.mxu0 0
      %297 = vmatpush1.bf16.msra.mxu0 0
      %298 = vmatprep.subr.bf16.mxu0 0
      %299 = vmatpush1.bf16.msra.mxu0 0
      %300 = vmatprep.subr.bf16.mxu0 0
      %301 = vmatpush1.bf16.msra.mxu0 0
      %302 = vmatprep.subr.bf16.mxu0 0
      %303 = vmatpush1.bf16.msra.mxu0 0
      %304 = vmatprep.subr.bf16.mxu0 0
      %305 = vmatpush1.bf16.msra.mxu0 0
      %306 = vmatprep.subr.bf16.mxu0 0
      %307 = vmatpush1.bf16.msra.mxu0 0
      %308 = vmatprep.subr.bf16.mxu0 0
      %309 = vmatpush1.bf16.msra.mxu0 0
      %310 = vmatprep.subr.bf16.mxu0 0
      %311 = vmatpush1.bf16.msra.mxu0 0
      %312 = vmatprep.subr.bf16.mxu0 0
      %313 = vmatpush1.bf16.msra.mxu0 0
      %314 = vmatprep.subr.bf16.mxu0 0
      %315 = vmatpush1.bf16.msra.mxu0 0
      %316 = vmatprep.subr.bf16.mxu0 0
      %317 = vmatpush1.bf16.msra.mxu0 0
      %318 = vmatprep.subr.bf16.mxu0 0
      %319 = vmatpush1.bf16.msra.mxu0 0
      %320 = vmatprep.mubr.bf16.mxu0 0
      %321 = vmatmul.mubr.bf16.gmra.mrb[0].mxu0 %v243
      %v322 = vpop.f32.mrb[0].mxu0
      %v323 = vadd.f32 %v200, %v322
      %v324 = vpop.f32.mrb[0].mxu0
      %v325 = vpop.f32.mrb[0].mxu0
      %v326 = vadd.f32 %v200, %v325
      %v327 = vpop.f32.mrb[0].mxu0
      %328 = vdwg.mxu0
      %v329 = vpack.c.bf16 %v284, %v280
      %v330 = vpack.c.bf16 %v286, %v282
      %v331 = vpack.c.bf16 %v326, %v323
      %v335 = vunpack.c.l.b16 %v329
      %v336 = vunpack.c.l.b16 %v330
      %v337 = vunpack.c.l.b16 %v331
      %v338 = vunpack.c.h.b16 %v329
      %v339 = vunpack.c.h.b16 %v330
      %v340 = vunpack.c.h.b16 %v331
      %v341 = vpack.c.b16 %v336, %v335
      %v342 = vpack.c.b16 %v337, %v337
      %v343 = vpack.c.b16 %v339, %v338
      %v344 = vpack.c.b16 %v340, %v340
      %349 = vst [vmem:[%s174] sm:$0xff] %v341
      %350 = vst [vmem:[%s174 + $0x8] sm:$0xf] %v342
      %351 = vst [vmem:[%s174 + $0xc] sm:$0xff] %v343
      %352 = vst [vmem:[%s174 + $0x14] sm:$0xf] %v344
      %s353 = smul.u32 2, %s14
      %p354 = scmp.lt.s32.totalorder %s353, 3
      %s355 = scalar_select %p354, %s353, 3
      %s356 = smul.addr %s355, 3
      %s357 = smul.addr %s356, 4
      %s358 = scalar_lea.vmem %s3, %s357
      // Predicated region
      $region33: #{bert_layer_forward.5} parent=31 // pred_check
        %p359 = pneg %p100
      $region34: #{bert_layer_forward.5} parent=31 // pred_check_branch
        %361 = sbr.rel (%p359) target = $region36
      $region35: #{bert_layer_forward.5} parent=31 // pred_region
        %s362 = smul.u32 2, %s14
      $region36: #{bert_layer_forward.5} parent=31 // pred_fallthru
        _
    $region32: #{bert_layer_forward.5} parent=5 // pred_fallthru
      _
    %p363 = scmp.le.s32.totalorder 2, %s9
    // Predicated region
    $region37: #{bert_layer_forward.5} parent=5 // pred_check
      %p364 = pneg %p363
    $region38: #{bert_layer_forward.5} parent=5 // pred_check_branch
      %366 = sbr.rel (%p364) target = $region40
    $region39: #{bert_layer_forward.5} parent=5 // pred_region
      %s367 = ssub.s32 %s9, 2
      // Predicated region
      $region41: #{bert_layer_forward.5} parent=39 // pred_check
        %p368 = pneg %p106
      $region42: #{bert_layer_forward.5} parent=39 // pred_check_branch
        %370 = sbr.rel (%p368) target = $region44
      $region43: #{bert_layer_forward.5} parent=39 // pred_region
        %s371 = smul.u32 2, %s15
        %p372 = scmp.lt.s32.totalorder %s371, 3
        %s373 = scalar_select %p372, %s371, 3
        %s374 = smul.addr %s373, 3
        %s375 = smul.addr %s374, 4
        %s376 = scalar_lea.vmem %s3, %s375
      $region44: #{bert_layer_forward.5} parent=39 // pred_fallthru
        _
    $region40: #{bert_layer_forward.5} parent=5 // pred_fallthru
      _
  $region6: #{bert_layer_forward.5} parent=0 // loop_footer
    %s13 = sadd.s32 1, %s9
  $region7: #{bert_layer_forward.5} parent=0 // loop_footer_branch
    %8 = sbr.rel target = $region3
  $region8: #{bert_layer_forward.5} parent=0 // loop_exit
    _

// kernel: bert_layer_forward.6
$region0: #{bert_layer_forward.6}
  #allocation0 [shape = 'u32[]', space=smem, size = 0x4, offset = 0x4, fixed_abs, tag = 'smem constant byte address 0x4 - core index']
  #allocation1 [shape = 'u32[144,128]{1,0:T(1,128)}', space=vmem, size = 0x12000, scoped, tag = 'internal scratch']
  %s0 = inlined_call_operand.vmem [shape: bf16[4,16,64], index: 0, kind: input, shape index: {}]
  %s1 = inlined_call_operand.vmem [shape: bf16[4,16,64], index: 1, kind: input, shape index: {}]
  %s2 = inlined_call_operand.vmem [shape: bf16[4,16,64], index: 2, kind: input, shape index: {}]
  %s3 = inlined_call_operand.vmem [shape: f32[4,1,16], index: 3, kind: input, shape index: {}]
  %s4 = inlined_call_operand.vmem [shape: bf16[4,16,64], index: 4, kind: output, shape index: {}]
  %s5 = sld [smem:[#allocation0]]
  $region49: #{bert_layer_forward.6} parent=0
    _
  %s7 = ssub.s32 1, %s5
  %s8 = scalar_select 0, %s7, %s5
  loop: start=0, step=1, limit=6
  $region2: #{bert_layer_forward.6} parent=0 // loop_pre_header
    _
  $region3: #{bert_layer_forward.6} parent=0 // loop_header
    %s10 = sphi 0, %s14
    %p11 = scmp.ge.s32.totalorder %s10, 6
    %s20 = sphi 0, %s22
    %s23 = sphi 0, %s20
    %s24 = sphi 0, %s23
    %s40 = sphi 0, %s24
    %s46 = sphi 0, %s48
    %s49 = sphi 0, %s46
    %s50 = sphi 0, %s49
    %s66 = sphi 0, %s50
    %s72 = sphi 0, %s74
    %s75 = sphi 0, %s72
    %s76 = sphi 0, %s75
    %s92 = sphi 0, %s76
    %s98 = sphi 0, %s100
    %s101 = sphi 0, %s98
    %s102 = sphi 0, %s101
    %s118 = sphi 0, %s102
    %s124 = sphi 0, %s126
    %s127 = sphi 0, %s124
    %s128 = sphi 0, %s127
    %s144 = sphi 0, %s128
  $region4: #{bert_layer_forward.6} parent=0 // loop_header_branch
    %13 = sbr.rel (%p11) target = $region8
  $region5: #{bert_layer_forward.6} parent=0 // loop_body
    %s15 = ssub.s32 %s10, 1
    %s16 = ssub.s32 %s10, 2
    %s17 = sadd.s32 %s10, 1
    %s18 = ssub.s32 %s10, %s17
    %p19 = scmp.eq.s32.totalorder %s18, 0
    %s21 = sadd.s32 %s20, 1
    %s22 = scalar_select %p19, %s20, %s21
    %p25 = pneg %p19
    %p26 = scmp.eq.s32.totalorder %s10, 3
    %p27 = por %p25, %p26
    %p28 = scmp.ne.s32.totalorder %s20, %s23
    %p29 = scmp.eq.s32.totalorder %s10, 0
    %p30 = por %p28, %p29
    %p31 = scmp.ne.s32.totalorder %s20, %s23
    %p32 = scmp.eq.s32.totalorder %s15, 3
    %p33 = por %p31, %p32
    %p34 = scmp.ne.s32.totalorder %s23, %s24
    %p35 = scmp.eq.s32.totalorder %s15, 0
    %p36 = por %p34, %p35
    %p37 = scmp.ne.s32.totalorder %s23, %s24
    %p38 = scmp.eq.s32.totalorder %s16, 3
    %p39 = por %p37, %p38
    %p41 = scmp.ne.s32.totalorder %s24, %s40
    %p42 = scmp.eq.s32.totalorder %s16, 0
    %p43 = por %p41, %p42
    %s44 = ssub.s32 %s10, %s17
    %p45 = scmp.eq.s32.totalorder %s44, 0
    %s47 = sadd.s32 %s46, 1
    %s48 = scalar_select %p45, %s46, %s47
    %p51 = pneg %p45
    %p52 = scmp.eq.s32.totalorder %s10, 3
    %p53 = por %p51, %p52
    %p54 = scmp.ne.s32.totalorder %s46, %s49
    %p55 = scmp.eq.s32.totalorder %s10, 0
    %p56 = por %p54, %p55
    %p57 = scmp.ne.s32.totalorder %s46, %s49
    %p58 = scmp.eq.s32.totalorder %s15, 3
    %p59 = por %p57, %p58
    %p60 = scmp.ne.s32.totalorder %s49, %s50
    %p61 = scmp.eq.s32.totalorder %s15, 0
    %p62 = por %p60, %p61
    %p63 = scmp.ne.s32.totalorder %s49, %s50
    %p64 = scmp.eq.s32.totalorder %s16, 3
    %p65 = por %p63, %p64
    %p67 = scmp.ne.s32.totalorder %s50, %s66
    %p68 = scmp.eq.s32.totalorder %s16, 0
    %p69 = por %p67, %p68
    %s70 = ssub.s32 %s10, %s17
    %p71 = scmp.eq.s32.totalorder %s70, 0
    %s73 = sadd.s32 %s72, 1
    %s74 = scalar_select %p71, %s72, %s73
    %p77 = pneg %p71
    %p78 = scmp.eq.s32.totalorder %s10, 3
    %p79 = por %p77, %p78
    %p80 = scmp.ne.s32.totalorder %s72, %s75
    %p81 = scmp.eq.s32.totalorder %s10, 0
    %p82 = por %p80, %p81
    %p83 = scmp.ne.s32.totalorder %s72, %s75
    %p84 = scmp.eq.s32.totalorder %s15, 3
    %p85 = por %p83, %p84
    %p86 = scmp.ne.s32.totalorder %s75, %s76
    %p87 = scmp.eq.s32.totalorder %s15, 0
    %p88 = por %p86, %p87
    %p89 = scmp.ne.s32.totalorder %s75, %s76
    %p90 = scmp.eq.s32.totalorder %s16, 3
    %p91 = por %p89, %p90
    %p93 = scmp.ne.s32.totalorder %s76, %s92
    %p94 = scmp.eq.s32.totalorder %s16, 0
    %p95 = por %p93, %p94
    %s96 = ssub.s32 %s10, %s17
    %p97 = scmp.eq.s32.totalorder %s96, 0
    %s99 = sadd.s32 %s98, 1
    %s100 = scalar_select %p97, %s98, %s99
    %p103 = pneg %p97
    %p104 = scmp.eq.s32.totalorder %s10, 3
    %p105 = por %p103, %p104
    %p106 = scmp.ne.s32.totalorder %s98, %s101
    %p107 = scmp.eq.s32.totalorder %s10, 0
    %p108 = por %p106, %p107
    %p109 = scmp.ne.s32.totalorder %s98, %s101
    %p110 = scmp.eq.s32.totalorder %s15, 3
    %p111 = por %p109, %p110
    %p112 = scmp.ne.s32.totalorder %s101, %s102
    %p113 = scmp.eq.s32.totalorder %s15, 0
    %p114 = por %p112, %p113
    %p115 = scmp.ne.s32.totalorder %s101, %s102
    %p116 = scmp.eq.s32.totalorder %s16, 3
    %p117 = por %p115, %p116
    %p119 = scmp.ne.s32.totalorder %s102, %s118
    %p120 = scmp.eq.s32.totalorder %s16, 0
    %p121 = por %p119, %p120
    %s122 = ssub.s32 %s10, %s17
    %p123 = scmp.eq.s32.totalorder %s122, 0
    %s125 = sadd.s32 %s124, 1
    %s126 = scalar_select %p123, %s124, %s125
    %p129 = pneg %p123
    %p130 = scmp.eq.s32.totalorder %s10, 3
    %p131 = por %p129, %p130
    %p132 = scmp.ne.s32.totalorder %s124, %s127
    %p133 = scmp.eq.s32.totalorder %s10, 0
    %p134 = por %p132, %p133
    %p135 = scmp.ne.s32.totalorder %s124, %s127
    %p136 = scmp.eq.s32.totalorder %s15, 3
    %p137 = por %p135, %p136
    %p138 = scmp.ne.s32.totalorder %s127, %s128
    %p139 = scmp.eq.s32.totalorder %s15, 0
    %p140 = por %p138, %p139
    %p141 = scmp.ne.s32.totalorder %s127, %s128
    %p142 = scmp.eq.s32.totalorder %s16, 3
    %p143 = por %p141, %p142
    %p145 = scmp.ne.s32.totalorder %s128, %s144
    %p146 = scmp.eq.s32.totalorder %s16, 0
    %p147 = por %p145, %p146
    %p148 = scmp.le.s32.totalorder 1, %s10
    %p149 = scmp.lt.s32.totalorder %s10, 5
    %p150 = pnand %p148, %p149
    %p151 = pneg %p150
    // Predicated region
    $region9: #{bert_layer_forward.6} parent=5 // pred_check
      _
    $region10: #{bert_layer_forward.6} parent=5 // pred_check_branch
      %153 = sbr.rel (%p150) target = $region12
    $region11: #{bert_layer_forward.6} parent=5 // pred_region
      %s154 = ssub.s32 %s10, 1
    $region12: #{bert_layer_forward.6} parent=5 // pred_fallthru
      _
    %p155 = scmp.lt.s32.totalorder %s10, 4
    // Predicated region
    $region13: #{bert_layer_forward.6} parent=5 // pred_check
      %p156 = pneg %p155
    $region14: #{bert_layer_forward.6} parent=5 // pred_check_branch
      %158 = sbr.rel (%p156) target = $region16
    $region15: #{bert_layer_forward.6} parent=5 // pred_region
      // Predicated region
      $region17: #{bert_layer_forward.6} parent=15 // pred_check
        %p159 = pneg %p30
      $region18: #{bert_layer_forward.6} parent=15 // pred_check_branch
        %161 = sbr.rel (%p159) target = $region20
      $region19: #{bert_layer_forward.6} parent=15 // pred_region
        %p162 = scmp.lt.s32.totalorder %s10, 3
        %s163 = scalar_select %p162, %s10, 3
        %s164 = smul.addr %s163, 2
        %s165 = smul.addr %s164, 4
        %s166 = scalar_lea.vmem %s0, %s165
      $region20: #{bert_layer_forward.6} parent=15 // pred_fallthru
        _
      // Predicated region
      $region21: #{bert_layer_forward.6} parent=15 // pred_check
        %p167 = pneg %p56
      $region22: #{bert_layer_forward.6} parent=15 // pred_check_branch
        %169 = sbr.rel (%p167) target = $region24
      $region23: #{bert_layer_forward.6} parent=15 // pred_region
        %p170 = scmp.lt.s32.totalorder %s10, 3
        %s171 = scalar_select %p170, %s10, 3
        %s172 = smul.addr %s171, 2
        %s173 = smul.addr %s172, 4
        %s174 = scalar_lea.vmem %s1, %s173
      $region24: #{bert_layer_forward.6} parent=15 // pred_fallthru
        _
      // Predicated region
      $region25: #{bert_layer_forward.6} parent=15 // pred_check
        %p175 = pneg %p82
      $region26: #{bert_layer_forward.6} parent=15 // pred_check_branch
        %177 = sbr.rel (%p175) target = $region28
      $region27: #{bert_layer_forward.6} parent=15 // pred_region
        %p178 = scmp.lt.s32.totalorder %s10, 3
        %s179 = scalar_select %p178, %s10, 3
        %s180 = smul.addr %s179, 2
        %s181 = smul.addr %s180, 4
        %s182 = scalar_lea.vmem %s2, %s181
      $region28: #{bert_layer_forward.6} parent=15 // pred_fallthru
        _
      // Predicated region
      $region29: #{bert_layer_forward.6} parent=15 // pred_check
        %p183 = pneg %p108
      $region30: #{bert_layer_forward.6} parent=15 // pred_check_branch
        %185 = sbr.rel (%p183) target = $region32
      $region31: #{bert_layer_forward.6} parent=15 // pred_region
        %p186 = scmp.lt.s32.totalorder %s10, 3
        %s187 = scalar_select %p186, %s10, 3
        %s188 = scalar_lea.vmem %s3, %s187
      $region32: #{bert_layer_forward.6} parent=15 // pred_fallthru
        _
    $region16: #{bert_layer_forward.6} parent=5 // pred_fallthru
      _
    %p189 = scmp.le.s32.totalorder 1, %s10
    %p190 = scmp.lt.s32.totalorder %s10, 5
    %p191 = pnand %p189, %p190
    %p192 = pneg %p191
    // Predicated region
    $region33: #{bert_layer_forward.6} parent=5 // pred_check
      _
    $region34: #{bert_layer_forward.6} parent=5 // pred_check_branch
      %194 = sbr.rel (%p191) target = $region36
    $region35: #{bert_layer_forward.6} parent=5 // pred_region
      %s195 = ssub.s32 %s10, 1
      %p196 = scmp.lt.s32.totalorder %s15, 3
      %s197 = scalar_select %p196, %s15, 3
      %s198 = smul.addr %s197, 2
      %s199 = smul.addr %s198, 4
      %s200 = scalar_lea.vmem %s0, %s199
      %p201 = pneg %p36
      %p202 = pneg %p33
      %p203 = scmp.lt.s32.totalorder %s15, 3
      %s204 = scalar_select %p203, %s15, 3
      %s205 = smul.addr %s204, 2
      %s206 = smul.addr %s205, 4
      %s207 = scalar_lea.vmem %s1, %s206
      %p208 = pneg %p62
      %p209 = pneg %p59
      %p210 = scmp.lt.s32.totalorder %s15, 3
      %s211 = scalar_select %p210, %s15, 3
      %s212 = smul.addr %s211, 2
      %s213 = smul.addr %s212, 4
      %s214 = scalar_lea.vmem %s2, %s213
      %p215 = pneg %p88
      %p216 = pneg %p85
      %p217 = scmp.lt.s32.totalorder %s15, 3
      %s218 = scalar_select %p217, %s15, 3
      %s219 = scalar_lea.vmem %s3, %s218
      %p220 = pneg %p114
      %p221 = pneg %p111
      %p222 = pneg %p140
      %p223 = pneg %p137
      %p224 = scmp.lt.s32.totalorder %s15, 3
      %s225 = scalar_select %p224, %s15, 3
      %s226 = smul.addr %s225, 2
      %s227 = smul.addr %s226, 4
      %s228 = scalar_lea.vmem %s4, %s227
      %p229 = scmp.lt.s32.totalorder %s15, 3
      %s230 = scalar_select %p229, %s15, 3
      %s231 = smul.addr %s230, 2
      %s232 = smul.addr %s231, 4
      %s233 = scalar_lea.vmem %s0, %s232
      %p234 = scmp.lt.s32.totalorder %s15, 3
      %s235 = scalar_select %p234, %s15, 3
      %s236 = smul.addr %s235, 2
      %s237 = smul.addr %s236, 4
      %s238 = scalar_lea.vmem %s1, %s237
      %p239 = scmp.lt.s32.totalorder %s15, 3
      %s240 = scalar_select %p239, %s15, 3
      %s241 = smul.addr %s240, 2
      %s242 = smul.addr %s241, 4
      %s243 = scalar_lea.vmem %s2, %s242
      %p244 = scmp.lt.s32.totalorder %s15, 3
      %s245 = scalar_select %p244, %s15, 3
      %s246 = scalar_lea.vmem %s3, %s245
      %p247 = scmp.lt.s32.totalorder %s15, 3
      %s248 = scalar_select %p247, %s15, 3
      %s249 = smul.addr %s248, 2
      %s250 = smul.addr %s249, 4
      %s251 = scalar_lea.vmem %s4, %s250
      %v253 = vld [vmem:[%s233] sm:$0xf]
      %v254 = vld [vmem:[%s233 + $0x4] sm:$0xf]
      %v255 = vld [vmem:[%s238] sm:$0xf]
      %v256 = vld [vmem:[%s238 + $0x4] sm:$0xf]
      %v259 = vunpack.c.l.b16 %v253
      %v260 = vunpack.c.l.b16 %v254
      %v261 = vpack.c.b16 %v260, %v259
      %v264 = vunpack.c.l.b16 %v255
      %v265 = vunpack.c.l.b16 %v256
      %v266 = vpack.c.b16 %v265, %v264
      %vm267 = vcmask 523264
      %v269 = vsel %vm267, %v261, 0
      %v272 = vsel %vm267, %v266, 0
      %274 = vmatprep.subr.bf16.mxu0 0
      %275 = vmatpush1.bf16.xpose.msra.mxu0 %v272
      %276 = vmatprep.subr.bf16.mxu0 0
      %277 = vmatpush1.bf16.xpose.msra.mxu0 0
      %278 = vmatprep.subr.bf16.mxu0 0
      %279 = vmatpush1.bf16.xpose.msra.mxu0 0
      %280 = vmatprep.subr.bf16.mxu0 0
      %281 = vmatpush1.bf16.xpose.msra.mxu0 0
      %282 = vmatprep.subr.bf16.mxu0 0
      %283 = vmatpush1.bf16.xpose.msra.mxu0 0
      %284 = vmatprep.subr.bf16.mxu0 0
      %285 = vmatpush1.bf16.xpose.msra.mxu0 0
      %286 = vmatprep.subr.bf16.mxu0 0
      %287 = vmatpush1.bf16.xpose.msra.mxu0 0
      %288 = vmatprep.subr.bf16.mxu0 0
      %289 = vmatpush1.bf16.xpose.msra.mxu0 0
      %290 = vmatprep.subr.bf16.mxu0 0
      %291 = vmatpush1.bf16.xpose.msra.mxu0 0
      %292 = vmatprep.subr.bf16.mxu0 0
      %293 = vmatpush1.bf16.xpose.msra.mxu0 0
      %294 = vmatprep.subr.bf16.mxu0 0
      %295 = vmatpush1.bf16.xpose.msra.mxu0 0
      %296 = vmatprep.subr.bf16.mxu0 0
      %297 = vmatpush1.bf16.xpose.msra.mxu0 0
      %298 = vmatprep.subr.bf16.mxu0 0
      %299 = vmatpush1.bf16.xpose.msra.mxu0 0
      %300 = vmatprep.subr.bf16.mxu0 0
      %301 = vmatpush1.bf16.xpose.msra.mxu0 0
      %302 = vmatprep.subr.bf16.mxu0 0
      %303 = vmatpush1.bf16.xpose.msra.mxu0 0
      %304 = vmatprep.subr.bf16.mxu0 0
      %305 = vmatpush1.bf16.xpose.msra.mxu0 0
      %306 = vmatprep.mubr.bf16.mxu0 0
      %307 = vmatmul.mubr.bf16.gmra.mrb[0].mxu0 %v269
      %v308 = vpop.f32.mrb[0].mxu0
      %v309 = vadd.f32 0.0, %v308
      %v310 = vpop.f32.mrb[0].mxu0
      %v311 = vpop.f32.mrb[0].mxu0
      %v312 = vadd.f32 0.0, %v311
      %v313 = vpop.f32.mrb[0].mxu0
      %314 = vdwg.mxu0
      %v315 = vmul.f32 %v309, 0.125
      %v316 = vmul.f32 %v312, 0.125
      %v317 = vld [vmem:[%s246] sm:$0x1]
      %v319 = vlaneseq
      %v320 = vshrl.u32 %v319, 7
      %v321 = vsub.s32 0, %v320
      %v322 = vrot.slane %v317, %v321
      %v324 = vadd.f32 %v315, %v322
      %v325 = vadd.f32 %v316, %v322
      %vm326 = vcmask 130048
      %v327 = vsel %vm326, %v324, -inf
      %328 = vmax.xlane.f32.xlu0 %v327
      %v329 = vpop.xlane.xlu0 %328
      %v330 = vsel %vm326, %v325, -inf
      %331 = vmax.xlane.f32.xlu0 %v330
      %v332 = vpop.xlane.xlu0 %331
      %v333 = vsub.f32 %v324, %v329
      %v334 = vsub.f32 %v325, %v332
      %v335 = vmul.f32 %v333, 1.442695
      %v336 = vpow.pop %v335
      %v337 = vmul.f32 %v334, 1.442695
      %v338 = vpow.pop %v337
      %v339 = vsel %vm326, %v336, 0.0
      %340 = vadd.xlane.f32.xlu0 %v339
      %v341 = vpop.xlane.xlu0 %340
      %v342 = vsel %vm326, %v338, 0.0
      %343 = vadd.xlane.f32.xlu0 %v342
      %v344 = vpop.xlane.xlu0 %343
      %v345 = vrcp.pop %v341
      %v346 = vmul.f32 %v336, %v345
      %v347 = vrcp.pop %v344
      %v348 = vmul.f32 %v338, %v347
      %v349 = vpack.c.bf16 %v348, %v346
      %v350 = vld [vmem:[%s243] sm:$0xf]
      %v351 = vld [vmem:[%s243 + $0x4] sm:$0xf]
      %v354 = vunpack.c.l.b16 %v350
      %v355 = vunpack.c.l.b16 %v351
      %v356 = vpack.c.b16 %v355, %v354
      %v359 = vsel %vm326, %v349, 0
      %361 = vmatprep.subr.bf16.mxu0 0
      %362 = vmatpush1.bf16.msra.mxu0 %v356
      %363 = vmatprep.subr.bf16.mxu0 0
      %364 = vmatpush1.bf16.msra.mxu0 0
      %365 = vmatprep.subr.bf16.mxu0 0
      %366 = vmatpush1.bf16.msra.mxu0 0
      %367 = vmatprep.subr.bf16.mxu0 0
      %368 = vmatpush1.bf16.msra.mxu0 0
      %369 = vmatprep.subr.bf16.mxu0 0
      %370 = vmatpush1.bf16.msra.mxu0 0
      %371 = vmatprep.subr.bf16.mxu0 0
      %372 = vmatpush1.bf16.msra.mxu0 0
      %373 = vmatprep.subr.bf16.mxu0 0
      %374 = vmatpush1.bf16.msra.mxu0 0
      %375 = vmatprep.subr.bf16.mxu0 0
      %376 = vmatpush1.bf16.msra.mxu0 0
      %377 = vmatprep.subr.bf16.mxu0 0
      %378 = vmatpush1.bf16.msra.mxu0 0
      %379 = vmatprep.subr.bf16.mxu0 0
      %380 = vmatpush1.bf16.msra.mxu0 0
      %381 = vmatprep.subr.bf16.mxu0 0
      %382 = vmatpush1.bf16.msra.mxu0 0
      %383 = vmatprep.subr.bf16.mxu0 0
      %384 = vmatpush1.bf16.msra.mxu0 0
      %385 = vmatprep.subr.bf16.mxu0 0
      %386 = vmatpush1.bf16.msra.mxu0 0
      %387 = vmatprep.subr.bf16.mxu0 0
      %388 = vmatpush1.bf16.msra.mxu0 0
      %389 = vmatprep.subr.bf16.mxu0 0
      %390 = vmatpush1.bf16.msra.mxu0 0
      %391 = vmatprep.subr.bf16.mxu0 0
      %392 = vmatpush1.bf16.msra.mxu0 0
      %393 = vmatprep.mubr.bf16.mxu0 0
      %394 = vmatmul.mubr.bf16.gmra.mrb[0].mxu0 %v359
      %v395 = vpop.f32.mrb[0].mxu0
      %v396 = vadd.f32 0.0, %v395
      %v397 = vpop.f32.mrb[0].mxu0
      %v398 = vpop.f32.mrb[0].mxu0
      %v399 = vadd.f32 0.0, %v398
      %v400 = vpop.f32.mrb[0].mxu0
      %401 = vdwg.mxu0
      %v402 = vpack.c.bf16 %v399, %v396
      %v404 = vunpack.c.l.b16 %v402
      %v405 = vunpack.c.h.b16 %v402
      %v406 = vpack.c.b16 %v404, %v404
      %v407 = vpack.c.b16 %v405, %v405
      %vm410 = vcmask 519168
      %411 = vst.msk [vmem:[%s251] sm:$0xf] %vm410, %v406
      %412 = vst.msk [vmem:[%s251 + $0x4] sm:$0xf] %vm410, %v407
      %p413 = scmp.lt.s32.totalorder %s15, 3
      %s414 = scalar_select %p413, %s15, 3
      %s415 = smul.addr %s414, 2
      %s416 = smul.addr %s415, 4
      %s417 = scalar_lea.vmem %s4, %s416
      // Predicated region
      $region37: #{bert_layer_forward.6} parent=35 // pred_check
        %p418 = pneg %p137
      $region38: #{bert_layer_forward.6} parent=35 // pred_check_branch
        %420 = sbr.rel (%p418) target = $region40
      $region39: #{bert_layer_forward.6} parent=35 // pred_region
        _
      $region40: #{bert_layer_forward.6} parent=35 // pred_fallthru
        _
    $region36: #{bert_layer_forward.6} parent=5 // pred_fallthru
      _
    %p421 = scmp.le.s32.totalorder 2, %s10
    // Predicated region
    $region41: #{bert_layer_forward.6} parent=5 // pred_check
      %p422 = pneg %p421
    $region42: #{bert_layer_forward.6} parent=5 // pred_check_branch
      %424 = sbr.rel (%p422) target = $region44
    $region43: #{bert_layer_forward.6} parent=5 // pred_region
      %s425 = ssub.s32 %s10, 2
      // Predicated region
      $region45: #{bert_layer_forward.6} parent=43 // pred_check
        %p426 = pneg %p143
      $region46: #{bert_layer_forward.6} parent=43 // pred_check_branch
        %428 = sbr.rel (%p426) target = $region48
      $region47: #{bert_layer_forward.6} parent=43 // pred_region
        %p429 = scmp.lt.s32.totalorder %s16, 3
        %s430 = scalar_select %p429, %s16, 3
        %s431 = smul.addr %s430, 2
        %s432 = smul.addr %s431, 4
        %s433 = scalar_lea.vmem %s4, %s432
      $region48: #{bert_layer_forward.6} parent=43 // pred_fallthru
        _
    $region44: #{bert_layer_forward.6} parent=5 // pred_fallthru
      _
  $region6: #{bert_layer_forward.6} parent=0 // loop_footer
    %s14 = sadd.s32 1, %s10
  $region7: #{bert_layer_forward.6} parent=0 // loop_footer_branch
    %9 = sbr.rel target = $region3
  $region8: #{bert_layer_forward.6} parent=0 // loop_exit
    _

// kernel: bert_layer_forward.8
$region0: #{bert_layer_forward.8}
  #allocation0 [shape = 'u32[]', space=smem, size = 0x4, offset = 0x4, fixed_abs, tag = 'smem constant byte address 0x4 - core index']
  #allocation1 [shape = 'u32[144,128]{1,0:T(1,128)}', space=vmem, size = 0x12000, scoped, tag = 'internal scratch']
  %s0 = inlined_call_operand.vmem [shape: bf16[32,32], index: 0, kind: input, shape index: {}]
  %s1 = inlined_call_operand.vmem [shape: bf16[32,128], index: 1, kind: input, shape index: {}]
  %s2 = inlined_call_operand.vmem [shape: f32[1,128], index: 2, kind: input, shape index: {}]
  %s3 = inlined_call_operand.vmem [shape: bf16[32,128], index: 3, kind: output, shape index: {}]
  %s4 = sld [smem:[#allocation0]]
  $region45: #{bert_layer_forward.8} parent=0
    _
  %s6 = ssub.s32 1, %s4
  %s7 = scalar_select 0, %s6, %s4
  loop: start=0, step=1, limit=4
  $region2: #{bert_layer_forward.8} parent=0 // loop_pre_header
    _
  $region3: #{bert_layer_forward.8} parent=0 // loop_header
    %s9 = sphi 0, %s13
    %p10 = scmp.ge.s32.totalorder %s9, 4
    %s19 = sphi 0, %s21
    %s22 = sphi 0, %s19
    %s23 = sphi 0, %s22
    %s39 = sphi 0, %s23
    %s43 = sphi 0, %s43
    %s45 = sphi 0, %s43
    %s46 = sphi 0, %s45
    %s60 = sphi 0, %s46
    %s64 = sphi 0, %s64
    %s66 = sphi 0, %s64
    %s67 = sphi 0, %s66
    %s81 = sphi 0, %s67
    %s87 = sphi 0, %s89
    %s90 = sphi 0, %s87
    %s91 = sphi 0, %s90
    %s107 = sphi 0, %s91
  $region4: #{bert_layer_forward.8} parent=0 // loop_header_branch
    %12 = sbr.rel (%p10) target = $region8
  $region5: #{bert_layer_forward.8} parent=0 // loop_body
    %s14 = ssub.s32 %s9, 1
    %s15 = ssub.s32 %s9, 2
    %s16 = sadd.s32 %s9, 1
    %s17 = ssub.s32 %s9, %s16
    %p18 = scmp.eq.s32.totalorder %s17, 0
    %s20 = sadd.s32 %s19, 1
    %s21 = scalar_select %p18, %s19, %s20
    %p24 = pneg %p18
    %p25 = scmp.eq.s32.totalorder %s9, 1
    %p26 = por %p24, %p25
    %p27 = scmp.ne.s32.totalorder %s19, %s22
    %p28 = scmp.eq.s32.totalorder %s9, 0
    %p29 = por %p27, %p28
    %p30 = scmp.ne.s32.totalorder %s19, %s22
    %p31 = scmp.eq.s32.totalorder %s14, 1
    %p32 = por %p30, %p31
    %p33 = scmp.ne.s32.totalorder %s22, %s23
    %p34 = scmp.eq.s32.totalorder %s14, 0
    %p35 = por %p33, %p34
    %p36 = scmp.ne.s32.totalorder %s22, %s23
    %p37 = scmp.eq.s32.totalorder %s15, 1
    %p38 = por %p36, %p37
    %p40 = scmp.ne.s32.totalorder %s23, %s39
    %p41 = scmp.eq.s32.totalorder %s15, 0
    %p42 = por %p40, %p41
    %s44 = sadd.s32 %s43, 1
    %p47 = scmp.eq.s32.totalorder %s9, 1
    %p48 = scmp.ne.s32.totalorder %s43, %s45
    %p49 = scmp.eq.s32.totalorder %s9, 0
    %p50 = por %p48, %p49
    %p51 = scmp.ne.s32.totalorder %s43, %s45
    %p52 = scmp.eq.s32.totalorder %s14, 1
    %p53 = por %p51, %p52
    %p54 = scmp.ne.s32.totalorder %s45, %s46
    %p55 = scmp.eq.s32.totalorder %s14, 0
    %p56 = por %p54, %p55
    %p57 = scmp.ne.s32.totalorder %s45, %s46
    %p58 = scmp.eq.s32.totalorder %s15, 1
    %p59 = por %p57, %p58
    %p61 = scmp.ne.s32.totalorder %s46, %s60
    %p62 = scmp.eq.s32.totalorder %s15, 0
    %p63 = por %p61, %p62
    %s65 = sadd.s32 %s64, 1
    %p68 = scmp.eq.s32.totalorder %s9, 1
    %p69 = scmp.ne.s32.totalorder %s64, %s66
    %p70 = scmp.eq.s32.totalorder %s9, 0
    %p71 = por %p69, %p70
    %p72 = scmp.ne.s32.totalorder %s64, %s66
    %p73 = scmp.eq.s32.totalorder %s14, 1
    %p74 = por %p72, %p73
    %p75 = scmp.ne.s32.totalorder %s66, %s67
    %p76 = scmp.eq.s32.totalorder %s14, 0
    %p77 = por %p75, %p76
    %p78 = scmp.ne.s32.totalorder %s66, %s67
    %p79 = scmp.eq.s32.totalorder %s15, 1
    %p80 = por %p78, %p79
    %p82 = scmp.ne.s32.totalorder %s67, %s81
    %p83 = scmp.eq.s32.totalorder %s15, 0
    %p84 = por %p82, %p83
    %s85 = ssub.s32 %s9, %s16
    %p86 = scmp.eq.s32.totalorder %s85, 0
    %s88 = sadd.s32 %s87, 1
    %s89 = scalar_select %p86, %s87, %s88
    %p92 = pneg %p86
    %p93 = scmp.eq.s32.totalorder %s9, 1
    %p94 = por %p92, %p93
    %p95 = scmp.ne.s32.totalorder %s87, %s90
    %p96 = scmp.eq.s32.totalorder %s9, 0
    %p97 = por %p95, %p96
    %p98 = scmp.ne.s32.totalorder %s87, %s90
    %p99 = scmp.eq.s32.totalorder %s14, 1
    %p100 = por %p98, %p99
    %p101 = scmp.ne.s32.totalorder %s90, %s91
    %p102 = scmp.eq.s32.totalorder %s14, 0
    %p103 = por %p101, %p102
    %p104 = scmp.ne.s32.totalorder %s90, %s91
    %p105 = scmp.eq.s32.totalorder %s15, 1
    %p106 = por %p104, %p105
    %p108 = scmp.ne.s32.totalorder %s91, %s107
    %p109 = scmp.eq.s32.totalorder %s15, 0
    %p110 = por %p108, %p109
    %p111 = scmp.le.s32.totalorder 1, %s9
    %p112 = scmp.lt.s32.totalorder %s9, 3
    %p113 = pnand %p111, %p112
    %p114 = pneg %p113
    // Predicated region
    $region9: #{bert_layer_forward.8} parent=5 // pred_check
      _
    $region10: #{bert_layer_forward.8} parent=5 // pred_check_branch
      %116 = sbr.rel (%p113) target = $region12
    $region11: #{bert_layer_forward.8} parent=5 // pred_region
      %s117 = ssub.s32 %s9, 1
      // Predicated region
      $region13: #{bert_layer_forward.8} parent=11 // pred_check
        %p118 = pneg %p56
      $region14: #{bert_layer_forward.8} parent=11 // pred_check_branch
        %120 = sbr.rel (%p118) target = $region16
      $region15: #{bert_layer_forward.8} parent=11 // pred_region
        _
      $region16: #{bert_layer_forward.8} parent=11 // pred_fallthru
        _
      // Predicated region
      $region17: #{bert_layer_forward.8} parent=11 // pred_check
        %p121 = pneg %p77
      $region18: #{bert_layer_forward.8} parent=11 // pred_check_branch
        %123 = sbr.rel (%p121) target = $region20
      $region19: #{bert_layer_forward.8} parent=11 // pred_region
        _
      $region20: #{bert_layer_forward.8} parent=11 // pred_fallthru
        _
    $region12: #{bert_layer_forward.8} parent=5 // pred_fallthru
      _
    %p124 = scmp.lt.s32.totalorder %s9, 2
    // Predicated region
    $region21: #{bert_layer_forward.8} parent=5 // pred_check
      %p125 = pneg %p124
    $region22: #{bert_layer_forward.8} parent=5 // pred_check_branch
      %127 = sbr.rel (%p125) target = $region24
    $region23: #{bert_layer_forward.8} parent=5 // pred_region
      // Predicated region
      $region25: #{bert_layer_forward.8} parent=23 // pred_check
        %p128 = pneg %p29
      $region26: #{bert_layer_forward.8} parent=23 // pred_check_branch
        %130 = sbr.rel (%p128) target = $region28
      $region27: #{bert_layer_forward.8} parent=23 // pred_region
        %s131 = smul.u32 2, %s9
        %p132 = scmp.lt.s32.totalorder %s131, 3
        %s133 = scalar_select %p132, %s131, 3
        %s134 = smul.addr %s133, 4
        %s135 = scalar_lea.vmem %s0, %s134
        %s136 = smul.u32 2, %s9
      $region28: #{bert_layer_forward.8} parent=23 // pred_fallthru
        _
    $region24: #{bert_layer_forward.8} parent=5 // pred_fallthru
      _
    %p137 = scmp.le.s32.totalorder 1, %s9
    %p138 = scmp.lt.s32.totalorder %s9, 3
    %p139 = pnand %p137, %p138
    %p140 = pneg %p139
    // Predicated region
    $region29: #{bert_layer_forward.8} parent=5 // pred_check
      _
    $region30: #{bert_layer_forward.8} parent=5 // pred_check_branch
      %142 = sbr.rel (%p139) target = $region32
    $region31: #{bert_layer_forward.8} parent=5 // pred_region
      %s143 = ssub.s32 %s9, 1
      %s144 = smul.u32 2, %s14
      %p145 = scmp.lt.s32.totalorder %s144, 3
      %s146 = scalar_select %p145, %s144, 3
      %s147 = smul.addr %s146, 4
      %s148 = scalar_lea.vmem %s0, %s147
      %p149 = pneg %p35
      %p150 = pneg %p32
      %p151 = pneg %p56
      %p152 = pneg %p53
      %p153 = pneg %p77
      %p154 = pneg %p74
      %p155 = pneg %p103
      %p156 = pneg %p100
      %s157 = smul.u32 2, %s14
      %p158 = scmp.lt.s32.totalorder %s157, 3
      %s159 = scalar_select %p158, %s157, 3
      %s160 = smul.addr %s159, 4
      %s161 = scalar_lea.vmem %s3, %s160
      %s162 = smul.u32 2, %s14
      %p163 = scmp.lt.s32.totalorder %s162, 3
      %s164 = scalar_select %p163, %s162, 3
      %s165 = smul.addr %s164, 4
      %s166 = scalar_lea.vmem %s0, %s165
      %s167 = smul.u32 2, %s14
      %s168 = smul.u32 2, %s14
      %p169 = scmp.lt.s32.totalorder %s168, 3
      %s170 = scalar_select %p169, %s168, 3
      %s171 = smul.addr %s170, 4
      %s172 = scalar_lea.vmem %s3, %s171
      %s173 = smul.u32 2, %s14
      %v175 = vld [vmem:[%s166] sm:$0xf]
      %v176 = vld [vmem:[%s166 + $0x4] sm:$0xf]
      %v177 = vld [vmem:[%s1] sm:$0xf]
      %v178 = vld [vmem:[%s1 + $0x4] sm:$0xf]
      %v179 = vld [vmem:[%s1 + $0x8] sm:$0xf]
      %v180 = vld [vmem:[%s1 + $0xc] sm:$0xf]
      %v181 = vld [vmem:[%s2] sm:$0x1]
      %v183 = vlaneseq
      %v184 = vshrl.u32 %v183, 7
      %v185 = vsub.s32 0, %v184
      %v186 = vrot.slane %v181, %v185
      %v190 = vunpack.c.l.b16 %v175
      %v191 = vunpack.c.l.b16 %v176
      %v192 = vpack.c.b16 %v191, %v190
      %v197 = vunpack.c.l.b16 %v177
      %v198 = vunpack.c.l.b16 %v178
      %v199 = vunpack.c.l.b16 %v179
      %v200 = vunpack.c.l.b16 %v180
      %v201 = vpack.c.b16 %v198, %v197
      %v202 = vpack.c.b16 %v200, %v199
      %vm205 = vcmask 261120
      %v207 = vsel %vm205, %v192, 0
      %209 = vmatprep.subr.bf16.mxu0 0
      %210 = vmatpush1.bf16.msra.mxu0 %v201
      %211 = vmatprep.subr.bf16.mxu0 0
      %212 = vmatpush1.bf16.msra.mxu0 %v202
      %213 = vmatprep.subr.bf16.mxu0 0
      %214 = vmatpush1.bf16.msra.mxu0 0
      %215 = vmatprep.subr.bf16.mxu0 0
      %216 = vmatpush1.bf16.msra.mxu0 0
      %217 = vmatprep.subr.bf16.mxu0 0
      %218 = vmatpush1.bf16.msra.mxu0 0
      %219 = vmatprep.subr.bf16.mxu0 0
      %220 = vmatpush1.bf16.msra.mxu0 0
      %221 = vmatprep.subr.bf16.mxu0 0
      %222 = vmatpush1.bf16.msra.mxu0 0
      %223 = vmatprep.subr.bf16.mxu0 0
      %224 = vmatpush1.bf16.msra.mxu0 0
      %225 = vmatprep.subr.bf16.mxu0 0
      %226 = vmatpush1.bf16.msra.mxu0 0
      %227 = vmatprep.subr.bf16.mxu0 0
      %228 = vmatpush1.bf16.msra.mxu0 0
      %229 = vmatprep.subr.bf16.mxu0 0
      %230 = vmatpush1.bf16.msra.mxu0 0
      %231 = vmatprep.subr.bf16.mxu0 0
      %232 = vmatpush1.bf16.msra.mxu0 0
      %233 = vmatprep.subr.bf16.mxu0 0
      %234 = vmatpush1.bf16.msra.mxu0 0
      %235 = vmatprep.subr.bf16.mxu0 0
      %236 = vmatpush1.bf16.msra.mxu0 0
      %237 = vmatprep.subr.bf16.mxu0 0
      %238 = vmatpush1.bf16.msra.mxu0 0
      %239 = vmatprep.subr.bf16.mxu0 0
      %240 = vmatpush1.bf16.msra.mxu0 0
      %241 = vmatprep.mubr.bf16.mxu0 0
      %242 = vmatmul.mubr.bf16.gmra.mrb[0].mxu0 %v207
      %v243 = vpop.f32.mrb[0].mxu0
      %v244 = vadd.f32 %v186, %v243
      %v245 = vpop.f32.mrb[0].mxu0
      %v246 = vpop.f32.mrb[0].mxu0
      %v247 = vadd.f32 %v186, %v246
      %v248 = vpop.f32.mrb[0].mxu0
      %249 = vdwg.mxu0
      %v250 = vmul.f32 %v244, 0.5
      %v251 = vmul.f32 %v247, 0.5
      %v252 = vmul.f32 %v244, 0.70710677
      %v253 = vmul.f32 %v247, 0.70710677
      %v254 = verf.f32.pop %v252
      %v255 = verf.f32.pop %v253
      %v256 = vadd.f32 %v254, 1.0
      %v257 = vadd.f32 %v255, 1.0
      %v258 = vmul.f32 %v250, %v256
      %v259 = vmul.f32 %v251, %v257
      %v260 = vpack.c.bf16 %v259, %v258
      %v262 = vunpack.c.l.b16 %v260
      %v263 = vunpack.c.h.b16 %v260
      %v264 = vpack.c.b16 %v262, %v262
      %v265 = vpack.c.b16 %v263, %v263
      %268 = vst [vmem:[%s172] sm:$0xf] %v264
      %269 = vst [vmem:[%s172 + $0x4] sm:$0xf] %v265
      %s270 = smul.u32 2, %s14
      %p271 = scmp.lt.s32.totalorder %s270, 3
      %s272 = scalar_select %p271, %s270, 3
      %s273 = smul.addr %s272, 4
      %s274 = scalar_lea.vmem %s3, %s273
      // Predicated region
      $region33: #{bert_layer_forward.8} parent=31 // pred_check
        %p275 = pneg %p100
      $region34: #{bert_layer_forward.8} parent=31 // pred_check_branch
        %277 = sbr.rel (%p275) target = $region36
      $region35: #{bert_layer_forward.8} parent=31 // pred_region
        %s278 = smul.u32 2, %s14
      $region36: #{bert_layer_forward.8} parent=31 // pred_fallthru
        _
    $region32: #{bert_layer_forward.8} parent=5 // pred_fallthru
      _
    %p279 = scmp.le.s32.totalorder 2, %s9
    // Predicated region
    $region37: #{bert_layer_forward.8} parent=5 // pred_check
      %p280 = pneg %p279
    $region38: #{bert_layer_forward.8} parent=5 // pred_check_branch
      %282 = sbr.rel (%p280) target = $region40
    $region39: #{bert_layer_forward.8} parent=5 // pred_region
      %s283 = ssub.s32 %s9, 2
      // Predicated region
      $region41: #{bert_layer_forward.8} parent=39 // pred_check
        %p284 = pneg %p106
      $region42: #{bert_layer_forward.8} parent=39 // pred_check_branch
        %286 = sbr.rel (%p284) target = $region44
      $region43: #{bert_layer_forward.8} parent=39 // pred_region
        %s287 = smul.u32 2, %s15
        %p288 = scmp.lt.s32.totalorder %s287, 3
        %s289 = scalar_select %p288, %s287, 3
        %s290 = smul.addr %s289, 4
        %s291 = scalar_lea.vmem %s3, %s290
      $region44: #{bert_layer_forward.8} parent=39 // pred_fallthru
        _
    $region40: #{bert_layer_forward.8} parent=5 // pred_fallthru
      _
  $region6: #{bert_layer_forward.8} parent=0 // loop_footer
    %s13 = sadd.s32 1, %s9
  $region7: #{bert_layer_forward.8} parent=0 // loop_footer_branch
    %8 = sbr.rel target = $region3
  $region8: #{bert_layer_forward.8} parent=0 // loop_exit
    _

// kernel: bert_layer_forward.7
$region0: #{bert_layer_forward.7}
  #allocation0 [shape = 'u32[]', space=smem, size = 0x4, offset = 0x4, fixed_abs, tag = 'smem constant byte address 0x4 - core index']
  #allocation1 [shape = 'u32[144,128]{1,0:T(1,128)}', space=vmem, size = 0x12000, scoped, tag = 'internal scratch']
  %s0 = inlined_call_operand.vmem [shape: bf16[32,128], index: 0, kind: input, shape index: {}]
  %s1 = inlined_call_operand.vmem [shape: bf16[128,32], index: 1, kind: input, shape index: {}]
  %s2 = inlined_call_operand.vmem [shape: f32[1,32], index: 2, kind: input, shape index: {}]
  %s3 = inlined_call_operand.vmem [shape: f32[32,32], index: 3, kind: input, shape index: {}]
  %s4 = inlined_call_operand.vmem [shape: f32[1,32], index: 4, kind: input, shape index: {}]
  %s5 = inlined_call_operand.vmem [shape: f32[1,32], index: 5, kind: input, shape index: {}]
  %s6 = inlined_call_operand.vmem [shape: f32[32,32], index: 6, kind: output, shape index: {}]
  %s7 = sld [smem:[#allocation0]]
  $region57: #{bert_layer_forward.7} parent=0
    _
  %s9 = ssub.s32 1, %s7
  %s10 = scalar_select 0, %s9, %s7
  loop: start=0, step=1, limit=4
  $region2: #{bert_layer_forward.7} parent=0 // loop_pre_header
    _
  $region3: #{bert_layer_forward.7} parent=0 // loop_header
    %s12 = sphi 0, %s16
    %p13 = scmp.ge.s32.totalorder %s12, 4
    %s22 = sphi 0, %s24
    %s25 = sphi 0, %s22
    %s26 = sphi 0, %s25
    %s42 = sphi 0, %s26
    %s46 = sphi 0, %s46
    %s48 = sphi 0, %s46
    %s49 = sphi 0, %s48
    %s63 = sphi 0, %s49
    %s67 = sphi 0, %s67
    %s69 = sphi 0, %s67
    %s70 = sphi 0, %s69
    %s84 = sphi 0, %s70
    %s90 = sphi 0, %s92
    %s93 = sphi 0, %s90
    %s94 = sphi 0, %s93
    %s110 = sphi 0, %s94
    %s114 = sphi 0, %s114
    %s116 = sphi 0, %s114
    %s117 = sphi 0, %s116
    %s131 = sphi 0, %s117
    %s135 = sphi 0, %s135
    %s137 = sphi 0, %s135
    %s138 = sphi 0, %s137
    %s152 = sphi 0, %s138
    %s158 = sphi 0, %s160
    %s161 = sphi 0, %s158
    %s162 = sphi 0, %s161
    %s178 = sphi 0, %s162
  $region4: #{bert_layer_forward.7} parent=0 // loop_header_branch
    %15 = sbr.rel (%p13) target = $region8
  $region5: #{bert_layer_forward.7} parent=0 // loop_body
    %s17 = ssub.s32 %s12, 1
    %s18 = ssub.s32 %s12, 2
    %s19 = sadd.s32 %s12, 1
    %s20 = ssub.s32 %s12, %s19
    %p21 = scmp.eq.s32.totalorder %s20, 0
    %s23 = sadd.s32 %s22, 1
    %s24 = scalar_select %p21, %s22, %s23
    %p27 = pneg %p21
    %p28 = scmp.eq.s32.totalorder %s12, 1
    %p29 = por %p27, %p28
    %p30 = scmp.ne.s32.totalorder %s22, %s25
    %p31 = scmp.eq.s32.totalorder %s12, 0
    %p32 = por %p30, %p31
    %p33 = scmp.ne.s32.totalorder %s22, %s25
    %p34 = scmp.eq.s32.totalorder %s17, 1
    %p35 = por %p33, %p34
    %p36 = scmp.ne.s32.totalorder %s25, %s26
    %p37 = scmp.eq.s32.totalorder %s17, 0
    %p38 = por %p36, %p37
    %p39 = scmp.ne.s32.totalorder %s25, %s26
    %p40 = scmp.eq.s32.totalorder %s18, 1
    %p41 = por %p39, %p40
    %p43 = scmp.ne.s32.totalorder %s26, %s42
    %p44 = scmp.eq.s32.totalorder %s18, 0
    %p45 = por %p43, %p44
    %s47 = sadd.s32 %s46, 1
    %p50 = scmp.eq.s32.totalorder %s12, 1
    %p51 = scmp.ne.s32.totalorder %s46, %s48
    %p52 = scmp.eq.s32.totalorder %s12, 0
    %p53 = por %p51, %p52
    %p54 = scmp.ne.s32.totalorder %s46, %s48
    %p55 = scmp.eq.s32.totalorder %s17, 1
    %p56 = por %p54, %p55
    %p57 = scmp.ne.s32.totalorder %s48, %s49
    %p58 = scmp.eq.s32.totalorder %s17, 0
    %p59 = por %p57, %p58
    %p60 = scmp.ne.s32.totalorder %s48, %s49
    %p61 = scmp.eq.s32.totalorder %s18, 1
    %p62 = por %p60, %p61
    %p64 = scmp.ne.s32.totalorder %s49, %s63
    %p65 = scmp.eq.s32.totalorder %s18, 0
    %p66 = por %p64, %p65
    %s68 = sadd.s32 %s67, 1
    %p71 = scmp.eq.s32.totalorder %s12, 1
    %p72 = scmp.ne.s32.totalorder %s67, %s69
    %p73 = scmp.eq.s32.totalorder %s12, 0
    %p74 = por %p72, %p73
    %p75 = scmp.ne.s32.totalorder %s67, %s69
    %p76 = scmp.eq.s32.totalorder %s17, 1
    %p77 = por %p75, %p76
    %p78 = scmp.ne.s32.totalorder %s69, %s70
    %p79 = scmp.eq.s32.totalorder %s17, 0
    %p80 = por %p78, %p79
    %p81 = scmp.ne.s32.totalorder %s69, %s70
    %p82 = scmp.eq.s32.totalorder %s18, 1
    %p83 = por %p81, %p82
    %p85 = scmp.ne.s32.totalorder %s70, %s84
    %p86 = scmp.eq.s32.totalorder %s18, 0
    %p87 = por %p85, %p86
    %s88 = ssub.s32 %s12, %s19
    %p89 = scmp.eq.s32.totalorder %s88, 0
    %s91 = sadd.s32 %s90, 1
    %s92 = scalar_select %p89, %s90, %s91
    %p95 = pneg %p89
    %p96 = scmp.eq.s32.totalorder %s12, 1
    %p97 = por %p95, %p96
    %p98 = scmp.ne.s32.totalorder %s90, %s93
    %p99 = scmp.eq.s32.totalorder %s12, 0
    %p100 = por %p98, %p99
    %p101 = scmp.ne.s32.totalorder %s90, %s93
    %p102 = scmp.eq.s32.totalorder %s17, 1
    %p103 = por %p101, %p102
    %p104 = scmp.ne.s32.totalorder %s93, %s94
    %p105 = scmp.eq.s32.totalorder %s17, 0
    %p106 = por %p104, %p105
    %p107 = scmp.ne.s32.totalorder %s93, %s94
    %p108 = scmp.eq.s32.totalorder %s18, 1
    %p109 = por %p107, %p108
    %p111 = scmp.ne.s32.totalorder %s94, %s110
    %p112 = scmp.eq.s32.totalorder %s18, 0
    %p113 = por %p111, %p112
    %s115 = sadd.s32 %s114, 1
    %p118 = scmp.eq.s32.totalorder %s12, 1
    %p119 = scmp.ne.s32.totalorder %s114, %s116
    %p120 = scmp.eq.s32.totalorder %s12, 0
    %p121 = por %p119, %p120
    %p122 = scmp.ne.s32.totalorder %s114, %s116
    %p123 = scmp.eq.s32.totalorder %s17, 1
    %p124 = por %p122, %p123
    %p125 = scmp.ne.s32.totalorder %s116, %s117
    %p126 = scmp.eq.s32.totalorder %s17, 0
    %p127 = por %p125, %p126
    %p128 = scmp.ne.s32.totalorder %s116, %s117
    %p129 = scmp.eq.s32.totalorder %s18, 1
    %p130 = por %p128, %p129
    %p132 = scmp.ne.s32.totalorder %s117, %s131
    %p133 = scmp.eq.s32.totalorder %s18, 0
    %p134 = por %p132, %p133
    %s136 = sadd.s32 %s135, 1
    %p139 = scmp.eq.s32.totalorder %s12, 1
    %p140 = scmp.ne.s32.totalorder %s135, %s137
    %p141 = scmp.eq.s32.totalorder %s12, 0
    %p142 = por %p140, %p141
    %p143 = scmp.ne.s32.totalorder %s135, %s137
    %p144 = scmp.eq.s32.totalorder %s17, 1
    %p145 = por %p143, %p144
    %p146 = scmp.ne.s32.totalorder %s137, %s138
    %p147 = scmp.eq.s32.totalorder %s17, 0
    %p148 = por %p146, %p147
    %p149 = scmp.ne.s32.totalorder %s137, %s138
    %p150 = scmp.eq.s32.totalorder %s18, 1
    %p151 = por %p149, %p150
    %p153 = scmp.ne.s32.totalorder %s138, %s152
    %p154 = scmp.eq.s32.totalorder %s18, 0
    %p155 = por %p153, %p154
    %s156 = ssub.s32 %s12, %s19
    %p157 = scmp.eq.s32.totalorder %s156, 0
    %s159 = sadd.s32 %s158, 1
    %s160 = scalar_select %p157, %s158, %s159
    %p163 = pneg %p157
    %p164 = scmp.eq.s32.totalorder %s12, 1
    %p165 = por %p163, %p164
    %p166 = scmp.ne.s32.totalorder %s158, %s161
    %p167 = scmp.eq.s32.totalorder %s12, 0
    %p168 = por %p166, %p167
    %p169 = scmp.ne.s32.totalorder %s158, %s161
    %p170 = scmp.eq.s32.totalorder %s17, 1
    %p171 = por %p169, %p170
    %p172 = scmp.ne.s32.totalorder %s161, %s162
    %p173 = scmp.eq.s32.totalorder %s17, 0
    %p174 = por %p172, %p173
    %p175 = scmp.ne.s32.totalorder %s161, %s162
    %p176 = scmp.eq.s32.totalorder %s18, 1
    %p177 = por %p175, %p176
    %p179 = scmp.ne.s32.totalorder %s162, %s178
    %p180 = scmp.eq.s32.totalorder %s18, 0
    %p181 = por %p179, %p180
    %p182 = scmp.le.s32.totalorder 1, %s12
    %p183 = scmp.lt.s32.totalorder %s12, 3
    %p184 = pnand %p182, %p183
    %p185 = pneg %p184
    // Predicated region
    $region9: #{bert_layer_forward.7} parent=5 // pred_check
      _
    $region10: #{bert_layer_forward.7} parent=5 // pred_check_branch
      %187 = sbr.rel (%p184) target = $region12
    $region11: #{bert_layer_forward.7} parent=5 // pred_region
      %s188 = ssub.s32 %s12, 1
      // Predicated region
      $region13: #{bert_layer_forward.7} parent=11 // pred_check
        %p189 = pneg %p59
      $region14: #{bert_layer_forward.7} parent=11 // pred_check_branch
        %191 = sbr.rel (%p189) target = $region16
      $region15: #{bert_layer_forward.7} parent=11 // pred_region
        _
      $region16: #{bert_layer_forward.7} parent=11 // pred_fallthru
        _
      // Predicated region
      $region17: #{bert_layer_forward.7} parent=11 // pred_check
        %p192 = pneg %p80
      $region18: #{bert_layer_forward.7} parent=11 // pred_check_branch
        %194 = sbr.rel (%p192) target = $region20
      $region19: #{bert_layer_forward.7} parent=11 // pred_region
        _
      $region20: #{bert_layer_forward.7} parent=11 // pred_fallthru
        _
      // Predicated region
      $region21: #{bert_layer_forward.7} parent=11 // pred_check
        %p195 = pneg %p127
      $region22: #{bert_layer_forward.7} parent=11 // pred_check_branch
        %197 = sbr.rel (%p195) target = $region24
      $region23: #{bert_layer_forward.7} parent=11 // pred_region
        _
      $region24: #{bert_layer_forward.7} parent=11 // pred_fallthru
        _
      // Predicated region
      $region25: #{bert_layer_forward.7} parent=11 // pred_check
        %p198 = pneg %p148
      $region26: #{bert_layer_forward.7} parent=11 // pred_check_branch
        %200 = sbr.rel (%p198) target = $region28
      $region27: #{bert_layer_forward.7} parent=11 // pred_region
        _
      $region28: #{bert_layer_forward.7} parent=11 // pred_fallthru
        _
    $region12: #{bert_layer_forward.7} parent=5 // pred_fallthru
      _
    %p201 = scmp.lt.s32.totalorder %s12, 2
    // Predicated region
    $region29: #{bert_layer_forward.7} parent=5 // pred_check
      %p202 = pneg %p201
    $region30: #{bert_layer_forward.7} parent=5 // pred_check_branch
      %204 = sbr.rel (%p202) target = $region32
    $region31: #{bert_layer_forward.7} parent=5 // pred_region
      // Predicated region
      $region33: #{bert_layer_forward.7} parent=31 // pred_check
        %p205 = pneg %p32
      $region34: #{bert_layer_forward.7} parent=31 // pred_check_branch
        %207 = sbr.rel (%p205) target = $region36
      $region35: #{bert_layer_forward.7} parent=31 // pred_region
        %s208 = smul.u32 2, %s12
        %p209 = scmp.lt.s32.totalorder %s208, 3
        %s210 = scalar_select %p209, %s208, 3
        %s211 = smul.addr %s210, 4
        %s212 = scalar_lea.vmem %s0, %s211
        %s213 = smul.u32 2, %s12
      $region36: #{bert_layer_forward.7} parent=31 // pred_fallthru
        _
      // Predicated region
      $region37: #{bert_layer_forward.7} parent=31 // pred_check
        %p214 = pneg %p100
      $region38: #{bert_layer_forward.7} parent=31 // pred_check_branch
        %216 = sbr.rel (%p214) target = $region40
      $region39: #{bert_layer_forward.7} parent=31 // pred_region
        %s217 = smul.u32 2, %s12
        %p218 = scmp.lt.s32.totalorder %s217, 3
        %s219 = scalar_select %p218, %s217, 3
        %s220 = smul.addr %s219, 8
        %s221 = scalar_lea.vmem %s3, %s220
        %s222 = smul.u32 2, %s12
      $region40: #{bert_layer_forward.7} parent=31 // pred_fallthru
        _
    $region32: #{bert_layer_forward.7} parent=5 // pred_fallthru
      _
    %p223 = scmp.le.s32.totalorder 1, %s12
    %p224 = scmp.lt.s32.totalorder %s12, 3
    %p225 = pnand %p223, %p224
    %p226 = pneg %p225
    // Predicated region
    $region41: #{bert_layer_forward.7} parent=5 // pred_check
      _
    $region42: #{bert_layer_forward.7} parent=5 // pred_check_branch
      %228 = sbr.rel (%p225) target = $region44
    $region43: #{bert_layer_forward.7} parent=5 // pred_region
      %s229 = ssub.s32 %s12, 1
      %s230 = smul.u32 2, %s17
      %p231 = scmp.lt.s32.totalorder %s230, 3
      %s232 = scalar_select %p231, %s230, 3
      %s233 = smul.addr %s232, 4
      %s234 = scalar_lea.vmem %s0, %s233
      %p235 = pneg %p38
      %p236 = pneg %p35
      %p237 = pneg %p59
      %p238 = pneg %p56
      %p239 = pneg %p80
      %p240 = pneg %p77
      %s241 = smul.u32 2, %s17
      %p242 = scmp.lt.s32.totalorder %s241, 3
      %s243 = scalar_select %p242, %s241, 3
      %s244 = smul.addr %s243, 8
      %s245 = scalar_lea.vmem %s3, %s244
      %p246 = pneg %p106
      %p247 = pneg %p103
      %p248 = pneg %p127
      %p249 = pneg %p124
      %p250 = pneg %p148
      %p251 = pneg %p145
      %p252 = pneg %p174
      %p253 = pneg %p171
      %s254 = smul.u32 2, %s17
      %p255 = scmp.lt.s32.totalorder %s254, 3
      %s256 = scalar_select %p255, %s254, 3
      %s257 = smul.addr %s256, 8
      %s258 = scalar_lea.vmem %s6, %s257
      %s259 = smul.u32 2, %s17
      %p260 = scmp.lt.s32.totalorder %s259, 3
      %s261 = scalar_select %p260, %s259, 3
      %s262 = smul.addr %s261, 4
      %s263 = scalar_lea.vmem %s0, %s262
      %s264 = smul.u32 2, %s17
      %s265 = smul.u32 2, %s17
      %p266 = scmp.lt.s32.totalorder %s265, 3
      %s267 = scalar_select %p266, %s265, 3
      %s268 = smul.addr %s267, 8
      %s269 = scalar_lea.vmem %s3, %s268
      %s270 = smul.u32 2, %s17
      %s271 = smul.u32 2, %s17
      %p272 = scmp.lt.s32.totalorder %s271, 3
      %s273 = scalar_select %p272, %s271, 3
      %s274 = smul.addr %s273, 8
      %s275 = scalar_lea.vmem %s6, %s274
      %s276 = smul.u32 2, %s17
      %v278 = vld [vmem:[%s263] sm:$0xf]
      %v279 = vld [vmem:[%s263 + $0x4] sm:$0xf]
      %v280 = vld [vmem:[%s1] sm:$0xf]
      %v281 = vld [vmem:[%s1 + $0x4] sm:$0xf]
      %v282 = vld [vmem:[%s1 + $0x8] sm:$0xf]
      %v283 = vld [vmem:[%s1 + $0xc] sm:$0xf]
      %v284 = vld [vmem:[%s1 + $0x10] sm:$0xf]
      %v285 = vld [vmem:[%s1 + $0x14] sm:$0xf]
      %v286 = vld [vmem:[%s1 + $0x18] sm:$0xf]
      %v287 = vld [vmem:[%s1 + $0x1c] sm:$0xf]
      %v288 = vld [vmem:[%s1 + $0x20] sm:$0xf]
      %v289 = vld [vmem:[%s1 + $0x24] sm:$0xf]
      %v290 = vld [vmem:[%s1 + $0x28] sm:$0xf]
      %v291 = vld [vmem:[%s1 + $0x2c] sm:$0xf]
      %v292 = vld [vmem:[%s1 + $0x30] sm:$0xf]
      %v293 = vld [vmem:[%s1 + $0x34] sm:$0xf]
      %v294 = vld [vmem:[%s1 + $0x38] sm:$0xf]
      %v295 = vld [vmem:[%s1 + $0x3c] sm:$0xf]
      %v296 = vld [vmem:[%s2] sm:$0x1]
      %v298 = vlaneseq
      %v299 = vshrl.u32 %v298, 7
      %v300 = vsub.s32 0, %v299
      %v301 = vrot.slane %v296, %v300
      %v305 = vunpack.c.l.b16 %v278
      %v306 = vunpack.c.l.b16 %v279
      %v307 = vpack.c.b16 %v306, %v305
      %v325 = vunpack.c.l.b16 %v280
      %v326 = vunpack.c.l.b16 %v281
      %v327 = vunpack.c.l.b16 %v282
      %v328 = vunpack.c.l.b16 %v283
      %v329 = vunpack.c.l.b16 %v284
      %v330 = vunpack.c.l.b16 %v285
      %v331 = vunpack.c.l.b16 %v286
      %v332 = vunpack.c.l.b16 %v287
      %v333 = vunpack.c.l.b16 %v288
      %v334 = vunpack.c.l.b16 %v289
      %v335 = vunpack.c.l.b16 %v290
      %v336 = vunpack.c.l.b16 %v291
      %v337 = vunpack.c.l.b16 %v292
      %v338 = vunpack.c.l.b16 %v293
      %v339 = vunpack.c.l.b16 %v294
      %v340 = vunpack.c.l.b16 %v295
      %v341 = vpack.c.b16 %v326, %v325
      %v342 = vpack.c.b16 %v328, %v327
      %v343 = vpack.c.b16 %v330, %v329
      %v344 = vpack.c.b16 %v332, %v331
      %v345 = vpack.c.b16 %v334, %v333
      %v346 = vpack.c.b16 %v336, %v335
      %v347 = vpack.c.b16 %v338, %v337
      %v348 = vpack.c.b16 %v340, %v339
      %357 = vmatprep.subr.bf16.mxu0 0
      %358 = vmatpush1.bf16.msra.mxu0 %v341
      %359 = vmatprep.subr.bf16.mxu0 0
      %360 = vmatpush1.bf16.msra.mxu0 %v342
      %361 = vmatprep.subr.bf16.mxu0 0
      %362 = vmatpush1.bf16.msra.mxu0 %v343
      %363 = vmatprep.subr.bf16.mxu0 0
      %364 = vmatpush1.bf16.msra.mxu0 %v344
      %365 = vmatprep.subr.bf16.mxu0 0
      %366 = vmatpush1.bf16.msra.mxu0 %v345
      %367 = vmatprep.subr.bf16.mxu0 0
      %368 = vmatpush1.bf16.msra.mxu0 %v346
      %369 = vmatprep.subr.bf16.mxu0 0
      %370 = vmatpush1.bf16.msra.mxu0 %v347
      %371 = vmatprep.subr.bf16.mxu0 0
      %372 = vmatpush1.bf16.msra.mxu0 %v348
      %373 = vmatprep.subr.bf16.mxu0 0
      %374 = vmatpush1.bf16.msra.mxu0 0
      %375 = vmatprep.subr.bf16.mxu0 0
      %376 = vmatpush1.bf16.msra.mxu0 0
      %377 = vmatprep.subr.bf16.mxu0 0
      %378 = vmatpush1.bf16.msra.mxu0 0
      %379 = vmatprep.subr.bf16.mxu0 0
      %380 = vmatpush1.bf16.msra.mxu0 0
      %381 = vmatprep.subr.bf16.mxu0 0
      %382 = vmatpush1.bf16.msra.mxu0 0
      %383 = vmatprep.subr.bf16.mxu0 0
      %384 = vmatpush1.bf16.msra.mxu0 0
      %385 = vmatprep.subr.bf16.mxu0 0
      %386 = vmatpush1.bf16.msra.mxu0 0
      %387 = vmatprep.subr.bf16.mxu0 0
      %388 = vmatpush1.bf16.msra.mxu0 0
      %389 = vmatprep.mubr.bf16.mxu0 0
      %390 = vmatmul.mubr.bf16.gmra.mrb[0].mxu0 %v307
      %v391 = vpop.f32.mrb[0].mxu0
      %v392 = vadd.f32 %v301, %v391
      %v393 = vpop.f32.mrb[0].mxu0
      %v394 = vpop.f32.mrb[0].mxu0
      %v395 = vadd.f32 %v301, %v394
      %v396 = vpop.f32.mrb[0].mxu0
      %397 = vdwg.mxu0
      %v398 = vld [vmem:[%s269] sm:$0xff]
      %v399 = vld [vmem:[%s269 + $0x8] sm:$0xff]
      %v400 = vadd.f32 %v392, %v398
      %v401 = vadd.f32 %v395, %v399
      %vm402 = vcmask 261120
      %v403 = vsel %vm402, %v400, 0.0
      %404 = vadd.xlane.f32.xlu0 %v403
      %v405 = vpop.xlane.xlu0 %404
      %v406 = vsel %vm402, %v401, 0.0
      %407 = vadd.xlane.f32.xlu0 %v406
      %v408 = vpop.xlane.xlu0 %407
      %v409 = vrcp.pop 32.0
      %v410 = vmul.f32 %v405, %v409
      %v411 = vmul.f32 %v408, %v409
      %v412 = vsub.f32 %v400, %v410
      %v413 = vsub.f32 %v401, %v411
      %v414 = vmul.f32 %v412, %v412
      %v415 = vmul.f32 %v413, %v413
      %v416 = vsel %vm402, %v414, 0.0
      %417 = vadd.xlane.f32.xlu0 %v416
      %v418 = vpop.xlane.xlu0 %417
      %v419 = vsel %vm402, %v415, 0.0
      %420 = vadd.xlane.f32.xlu0 %v419
      %v421 = vpop.xlane.xlu0 %420
      %v422 = vmul.f32 %v418, %v409
      %v423 = vmul.f32 %v421, %v409
      %v424 = vadd.f32 %v422, 1e-12
      %v425 = vadd.f32 %v423, 1e-12
      %v426 = vrsqrt.pop %v424
      %v427 = vrsqrt.pop %v425
      %v428 = vmul.f32 %v412, %v426
      %v429 = vmul.f32 %v413, %v427
      %v430 = vld [vmem:[%s4] sm:$0x1]
      %v432 = vlaneseq
      %v433 = vshrl.u32 %v432, 7
      %v434 = vsub.s32 0, %v433
      %v435 = vrot.slane %v430, %v434
      %v437 = vmul.f32 %v428, %v435
      %v438 = vmul.f32 %v429, %v435
      %v439 = vld [vmem:[%s5] sm:$0x1]
      %v441 = vlaneseq
      %v442 = vshrl.u32 %v441, 7
      %v443 = vsub.s32 0, %v442
      %v444 = vrot.slane %v439, %v443
      %v446 = vadd.f32 %v437, %v444
      %v447 = vadd.f32 %v438, %v444
      %448 = vst.msk [vmem:[%s275] sm:$0xff] %vm402, %v446
      %449 = vst.msk [vmem:[%s275 + $0x8] sm:$0xff] %vm402, %v447
      %s450 = smul.u32 2, %s17
      %p451 = scmp.lt.s32.totalorder %s450, 3
      %s452 = scalar_select %p451, %s450, 3
      %s453 = smul.addr %s452, 8
      %s454 = scalar_lea.vmem %s6, %s453
      // Predicated region
      $region45: #{bert_layer_forward.7} parent=43 // pred_check
        %p455 = pneg %p171
      $region46: #{bert_layer_forward.7} parent=43 // pred_check_branch
        %457 = sbr.rel (%p455) target = $region48
      $region47: #{bert_layer_forward.7} parent=43 // pred_region
        %s458 = smul.u32 2, %s17
      $region48: #{bert_layer_forward.7} parent=43 // pred_fallthru
        _
    $region44: #{bert_layer_forward.7} parent=5 // pred_fallthru
      _
    %p459 = scmp.le.s32.totalorder 2, %s12
    // Predicated region
    $region49: #{bert_layer_forward.7} parent=5 // pred_check
      %p460 = pneg %p459
    $region50: #{bert_layer_forward.7} parent=5 // pred_check_branch
      %462 = sbr.rel (%p460) target = $region52
    $region51: #{bert_layer_forward.7} parent=5 // pred_region
      %s463 = ssub.s32 %s12, 2
      // Predicated region
      $region53: #{bert_layer_forward.7} parent=51 // pred_check
        %p464 = pneg %p177
      $region54: #{bert_layer_forward.7} parent=51 // pred_check_branch
        %466 = sbr.rel (%p464) target = $region56
      $region55: #{bert_layer_forward.7} parent=51 // pred_region
        %s467 = smul.u32 2, %s18
        %p468 = scmp.lt.s32.totalorder %s467, 3
        %s469 = scalar_select %p468, %s467, 3
        %s470 = smul.addr %s469, 8
        %s471 = scalar_lea.vmem %s6, %s470
      $region56: #{bert_layer_forward.7} parent=51 // pred_fallthru
        _
    $region52: #{bert_layer_forward.7} parent=5 // pred_fallthru
      _
  $region6: #{bert_layer_forward.7} parent=0 // loop_footer
    %s16 = sadd.s32 1, %s12
  $region7: #{bert_layer_forward.7} parent=0 // loop_footer_branch
    %11 = sbr.rel target = $region3
  $region8: #{bert_layer_forward.7} parent=0 // loop_exit
    _

// kernel: bert_layer_forward.9
$region0: #{bert_layer_forward.9}
  #allocation0 [shape = 'u32[]', space=smem, size = 0x4, offset = 0x4, fixed_abs, tag = 'smem constant byte address 0x4 - core index']
  #allocation1 [shape = 'u32[144,128]{1,0:T(1,128)}', space=vmem, size = 0x12000, scoped, tag = 'internal scratch']
  %s0 = inlined_call_operand.vmem [shape: bf16[32,128], index: 0, kind: input, shape index: {}]
  %s1 = inlined_call_operand.vmem [shape: bf16[128,32], index: 1, kind: input, shape index: {}]
  %s2 = inlined_call_operand.vmem [shape: f32[1,32], index: 2, kind: input, shape index: {}]
  %s3 = inlined_call_operand.vmem [shape: f32[32,32], index: 3, kind: input, shape index: {}]
  %s4 = inlined_call_operand.vmem [shape: f32[1,32], index: 4, kind: input, shape index: {}]
  %s5 = inlined_call_operand.vmem [shape: f32[1,32], index: 5, kind: input, shape index: {}]
  %s6 = inlined_call_operand.hbm [shape: f32[32,32], index: 6, kind: output, shape index: {}]
  %s7 = sld [smem:[#allocation0]]
  $region57: #{bert_layer_forward.9} parent=0
    _
  %s9 = ssub.s32 1, %s7
  %s10 = scalar_select 0, %s9, %s7
  $region1: #{bert_layer_forward.9} parent=0
    #allocation2 [shape = 'u8[16384]{0}', space=vmem, size = 0x4000, scoped, tag = 'output window, operand 0']
    #allocation3 [shape = 's32[2]{0}', space=sflag, size = 0x8, scoped, tag = 'scoped memory for bert_layer_forward.9']
    %11 = vsyncpa [#allocation3], 0
    %s12 = scalar_lea.sflag [#allocation3], 1
    %13 = vsyncpa %s12, 0
    loop: start=0, step=1, limit=4
    $region2: #{bert_layer_forward.9} parent=1 // loop_pre_header
      _
    $region3: #{bert_layer_forward.9} parent=1 // loop_header
      %s15 = sphi 0, %s19
      %p16 = scmp.ge.s32.totalorder %s15, 4
      %s25 = sphi 0, %s27
      %s28 = sphi 0, %s25
      %s29 = sphi 0, %s28
      %s45 = sphi 0, %s29
      %s49 = sphi 0, %s49
      %s51 = sphi 0, %s49
      %s52 = sphi 0, %s51
      %s66 = sphi 0, %s52
      %s70 = sphi 0, %s70
      %s72 = sphi 0, %s70
      %s73 = sphi 0, %s72
      %s87 = sphi 0, %s73
      %s93 = sphi 0, %s95
      %s96 = sphi 0, %s93
      %s97 = sphi 0, %s96
      %s113 = sphi 0, %s97
      %s117 = sphi 0, %s117
      %s119 = sphi 0, %s117
      %s120 = sphi 0, %s119
      %s134 = sphi 0, %s120
      %s138 = sphi 0, %s138
      %s140 = sphi 0, %s138
      %s141 = sphi 0, %s140
      %s155 = sphi 0, %s141
      %s161 = sphi 0, %s163
      %s164 = sphi 0, %s161
      %s165 = sphi 0, %s164
      %s181 = sphi 0, %s165
    $region4: #{bert_layer_forward.9} parent=1 // loop_header_branch
      %18 = sbr.rel (%p16) target = $region8
    $region5: #{bert_layer_forward.9} parent=1 // loop_body
      %s20 = ssub.s32 %s15, 1
      %s21 = ssub.s32 %s15, 2
      %s22 = sadd.s32 %s15, 1
      %s23 = ssub.s32 %s15, %s22
      %p24 = scmp.eq.s32.totalorder %s23, 0
      %s26 = sadd.s32 %s25, 1
      %s27 = scalar_select %p24, %s25, %s26
      %p30 = pneg %p24
      %p31 = scmp.eq.s32.totalorder %s15, 1
      %p32 = por %p30, %p31
      %p33 = scmp.ne.s32.totalorder %s25, %s28
      %p34 = scmp.eq.s32.totalorder %s15, 0
      %p35 = por %p33, %p34
      %p36 = scmp.ne.s32.totalorder %s25, %s28
      %p37 = scmp.eq.s32.totalorder %s20, 1
      %p38 = por %p36, %p37
      %p39 = scmp.ne.s32.totalorder %s28, %s29
      %p40 = scmp.eq.s32.totalorder %s20, 0
      %p41 = por %p39, %p40
      %p42 = scmp.ne.s32.totalorder %s28, %s29
      %p43 = scmp.eq.s32.totalorder %s21, 1
      %p44 = por %p42, %p43
      %p46 = scmp.ne.s32.totalorder %s29, %s45
      %p47 = scmp.eq.s32.totalorder %s21, 0
      %p48 = por %p46, %p47
      %s50 = sadd.s32 %s49, 1
      %p53 = scmp.eq.s32.totalorder %s15, 1
      %p54 = scmp.ne.s32.totalorder %s49, %s51
      %p55 = scmp.eq.s32.totalorder %s15, 0
      %p56 = por %p54, %p55
      %p57 = scmp.ne.s32.totalorder %s49, %s51
      %p58 = scmp.eq.s32.totalorder %s20, 1
      %p59 = por %p57, %p58
      %p60 = scmp.ne.s32.totalorder %s51, %s52
      %p61 = scmp.eq.s32.totalorder %s20, 0
      %p62 = por %p60, %p61
      %p63 = scmp.ne.s32.totalorder %s51, %s52
      %p64 = scmp.eq.s32.totalorder %s21, 1
      %p65 = por %p63, %p64
      %p67 = scmp.ne.s32.totalorder %s52, %s66
      %p68 = scmp.eq.s32.totalorder %s21, 0
      %p69 = por %p67, %p68
      %s71 = sadd.s32 %s70, 1
      %p74 = scmp.eq.s32.totalorder %s15, 1
      %p75 = scmp.ne.s32.totalorder %s70, %s72
      %p76 = scmp.eq.s32.totalorder %s15, 0
      %p77 = por %p75, %p76
      %p78 = scmp.ne.s32.totalorder %s70, %s72
      %p79 = scmp.eq.s32.totalorder %s20, 1
      %p80 = por %p78, %p79
      %p81 = scmp.ne.s32.totalorder %s72, %s73
      %p82 = scmp.eq.s32.totalorder %s20, 0
      %p83 = por %p81, %p82
      %p84 = scmp.ne.s32.totalorder %s72, %s73
      %p85 = scmp.eq.s32.totalorder %s21, 1
      %p86 = por %p84, %p85
      %p88 = scmp.ne.s32.totalorder %s73, %s87
      %p89 = scmp.eq.s32.totalorder %s21, 0
      %p90 = por %p88, %p89
      %s91 = ssub.s32 %s15, %s22
      %p92 = scmp.eq.s32.totalorder %s91, 0
      %s94 = sadd.s32 %s93, 1
      %s95 = scalar_select %p92, %s93, %s94
      %p98 = pneg %p92
      %p99 = scmp.eq.s32.totalorder %s15, 1
      %p100 = por %p98, %p99
      %p101 = scmp.ne.s32.totalorder %s93, %s96
      %p102 = scmp.eq.s32.totalorder %s15, 0
      %p103 = por %p101, %p102
      %p104 = scmp.ne.s32.totalorder %s93, %s96
      %p105 = scmp.eq.s32.totalorder %s20, 1
      %p106 = por %p104, %p105
      %p107 = scmp.ne.s32.totalorder %s96, %s97
      %p108 = scmp.eq.s32.totalorder %s20, 0
      %p109 = por %p107, %p108
      %p110 = scmp.ne.s32.totalorder %s96, %s97
      %p111 = scmp.eq.s32.totalorder %s21, 1
      %p112 = por %p110, %p111
      %p114 = scmp.ne.s32.totalorder %s97, %s113
      %p115 = scmp.eq.s32.totalorder %s21, 0
      %p116 = por %p114, %p115
      %s118 = sadd.s32 %s117, 1
      %p121 = scmp.eq.s32.totalorder %s15, 1
      %p122 = scmp.ne.s32.totalorder %s117, %s119
      %p123 = scmp.eq.s32.totalorder %s15, 0
      %p124 = por %p122, %p123
      %p125 = scmp.ne.s32.totalorder %s117, %s119
      %p126 = scmp.eq.s32.totalorder %s20, 1
      %p127 = por %p125, %p126
      %p128 = scmp.ne.s32.totalorder %s119, %s120
      %p129 = scmp.eq.s32.totalorder %s20, 0
      %p130 = por %p128, %p129
      %p131 = scmp.ne.s32.totalorder %s119, %s120
      %p132 = scmp.eq.s32.totalorder %s21, 1
      %p133 = por %p131, %p132
      %p135 = scmp.ne.s32.totalorder %s120, %s134
      %p136 = scmp.eq.s32.totalorder %s21, 0
      %p137 = por %p135, %p136
      %s139 = sadd.s32 %s138, 1
      %p142 = scmp.eq.s32.totalorder %s15, 1
      %p143 = scmp.ne.s32.totalorder %s138, %s140
      %p144 = scmp.eq.s32.totalorder %s15, 0
      %p145 = por %p143, %p144
      %p146 = scmp.ne.s32.totalorder %s138, %s140
      %p147 = scmp.eq.s32.totalorder %s20, 1
      %p148 = por %p146, %p147
      %p149 = scmp.ne.s32.totalorder %s140, %s141
      %p150 = scmp.eq.s32.totalorder %s20, 0
      %p151 = por %p149, %p150
      %p152 = scmp.ne.s32.totalorder %s140, %s141
      %p153 = scmp.eq.s32.totalorder %s21, 1
      %p154 = por %p152, %p153
      %p156 = scmp.ne.s32.totalorder %s141, %s155
      %p157 = scmp.eq.s32.totalorder %s21, 0
      %p158 = por %p156, %p157
      %s159 = ssub.s32 %s15, %s22
      %p160 = scmp.eq.s32.totalorder %s159, 0
      %s162 = sadd.s32 %s161, 1
      %s163 = scalar_select %p160, %s161, %s162
      %p166 = pneg %p160
      %p167 = scmp.eq.s32.totalorder %s15, 1
      %p168 = por %p166, %p167
      %p169 = scmp.ne.s32.totalorder %s161, %s164
      %p170 = scmp.eq.s32.totalorder %s15, 0
      %p171 = por %p169, %p170
      %p172 = scmp.ne.s32.totalorder %s161, %s164
      %p173 = scmp.eq.s32.totalorder %s20, 1
      %p174 = por %p172, %p173
      %p175 = scmp.ne.s32.totalorder %s164, %s165
      %p176 = scmp.eq.s32.totalorder %s20, 0
      %p177 = por %p175, %p176
      %p178 = scmp.ne.s32.totalorder %s164, %s165
      %p179 = scmp.eq.s32.totalorder %s21, 1
      %p180 = por %p178, %p179
      %p182 = scmp.ne.s32.totalorder %s165, %s181
      %p183 = scmp.eq.s32.totalorder %s21, 0
      %p184 = por %p182, %p183
      %p185 = scmp.le.s32.totalorder 1, %s15
      %p186 = scmp.lt.s32.totalorder %s15, 3
      %p187 = pnand %p185, %p186
      %p188 = pneg %p187
      // Predicated region
      $region9: #{bert_layer_forward.9} parent=5 // pred_check
        _
      $region10: #{bert_layer_forward.9} parent=5 // pred_check_branch
        %190 = sbr.rel (%p187) target = $region12
      $region11: #{bert_layer_forward.9} parent=5 // pred_region
        %s191 = ssub.s32 %s15, 1
        // Predicated region
        $region13: #{bert_layer_forward.9} parent=11 // pred_check
          %p192 = pneg %p62
        $region14: #{bert_layer_forward.9} parent=11 // pred_check_branch
          %194 = sbr.rel (%p192) target = $region16
        $region15: #{bert_layer_forward.9} parent=11 // pred_region
          _
        $region16: #{bert_layer_forward.9} parent=11 // pred_fallthru
          _
        // Predicated region
        $region17: #{bert_layer_forward.9} parent=11 // pred_check
          %p195 = pneg %p83
        $region18: #{bert_layer_forward.9} parent=11 // pred_check_branch
          %197 = sbr.rel (%p195) target = $region20
        $region19: #{bert_layer_forward.9} parent=11 // pred_region
          _
        $region20: #{bert_layer_forward.9} parent=11 // pred_fallthru
          _
        // Predicated region
        $region21: #{bert_layer_forward.9} parent=11 // pred_check
          %p198 = pneg %p130
        $region22: #{bert_layer_forward.9} parent=11 // pred_check_branch
          %200 = sbr.rel (%p198) target = $region24
        $region23: #{bert_layer_forward.9} parent=11 // pred_region
          _
        $region24: #{bert_layer_forward.9} parent=11 // pred_fallthru
          _
        // Predicated region
        $region25: #{bert_layer_forward.9} parent=11 // pred_check
          %p201 = pneg %p151
        $region26: #{bert_layer_forward.9} parent=11 // pred_check_branch
          %203 = sbr.rel (%p201) target = $region28
        $region27: #{bert_layer_forward.9} parent=11 // pred_region
          _
        $region28: #{bert_layer_forward.9} parent=11 // pred_fallthru
          _
      $region12: #{bert_layer_forward.9} parent=5 // pred_fallthru
        _
      %p204 = scmp.lt.s32.totalorder %s15, 2
      // Predicated region
      $region29: #{bert_layer_forward.9} parent=5 // pred_check
        %p205 = pneg %p204
      $region30: #{bert_layer_forward.9} parent=5 // pred_check_branch
        %207 = sbr.rel (%p205) target = $region32
      $region31: #{bert_layer_forward.9} parent=5 // pred_region
        // Predicated region
        $region33: #{bert_layer_forward.9} parent=31 // pred_check
          %p208 = pneg %p35
        $region34: #{bert_layer_forward.9} parent=31 // pred_check_branch
          %210 = sbr.rel (%p208) target = $region36
        $region35: #{bert_layer_forward.9} parent=31 // pred_region
          %s211 = smul.u32 2, %s15
          %p212 = scmp.lt.s32.totalorder %s211, 3
          %s213 = scalar_select %p212, %s211, 3
          %s214 = smul.addr %s213, 4
          %s215 = scalar_lea.vmem %s0, %s214
          %s216 = smul.u32 2, %s15
        $region36: #{bert_layer_forward.9} parent=31 // pred_fallthru
          _
        // Predicated region
        $region37: #{bert_layer_forward.9} parent=31 // pred_check
          %p217 = pneg %p103
        $region38: #{bert_layer_forward.9} parent=31 // pred_check_branch
          %219 = sbr.rel (%p217) target = $region40
        $region39: #{bert_layer_forward.9} parent=31 // pred_region
          %s220 = smul.u32 2, %s15
          %p221 = scmp.lt.s32.totalorder %s220, 3
          %s222 = scalar_select %p221, %s220, 3
          %s223 = smul.addr %s222, 8
          %s224 = scalar_lea.vmem %s3, %s223
          %s225 = smul.u32 2, %s15
        $region40: #{bert_layer_forward.9} parent=31 // pred_fallthru
          _
      $region32: #{bert_layer_forward.9} parent=5 // pred_fallthru
        _
      %p226 = scmp.le.s32.totalorder 1, %s15
      %p227 = scmp.lt.s32.totalorder %s15, 3
      %p228 = pnand %p226, %p227
      %p229 = pneg %p228
      // Predicated region
      $region41: #{bert_layer_forward.9} parent=5 // pred_check
        _
      $region42: #{bert_layer_forward.9} parent=5 // pred_check_branch
        %231 = sbr.rel (%p228) target = $region44
      $region43: #{bert_layer_forward.9} parent=5 // pred_region
        %s232 = ssub.s32 %s15, 1
        %s233 = smul.u32 2, %s20
        %p234 = scmp.lt.s32.totalorder %s233, 3
        %s235 = scalar_select %p234, %s233, 3
        %s236 = smul.addr %s235, 4
        %s237 = scalar_lea.vmem %s0, %s236
        %p238 = pneg %p41
        %p239 = pneg %p38
        %p240 = pneg %p62
        %p241 = pneg %p59
        %p242 = pneg %p83
        %p243 = pneg %p80
        %s244 = smul.u32 2, %s20
        %p245 = scmp.lt.s32.totalorder %s244, 3
        %s246 = scalar_select %p245, %s244, 3
        %s247 = smul.addr %s246, 8
        %s248 = scalar_lea.vmem %s3, %s247
        %p249 = pneg %p109
        %p250 = pneg %p106
        %p251 = pneg %p130
        %p252 = pneg %p127
        %p253 = pneg %p151
        %p254 = pneg %p148
        %p255 = pneg %p177
        %p256 = pneg %p174
        %s257 = sand.u32 %s164, 1
        %s258 = scalar_lea.sflag [#allocation3], %s257
        %s259 = sand.u32 %s164, 1
        %s260 = smul.addr %s259, 16
        %s261 = scalar_lea.vmem [#allocation2], %s260
        %s262 = smul.u32 2, %s20
        %p263 = scmp.lt.s32.totalorder %s262, 3
        %s264 = scalar_select %p263, %s262, 3
        %s265 = smul.addr %s264, 4
        %s266 = scalar_lea.vmem %s0, %s265
        %s267 = smul.u32 2, %s20
        %s268 = smul.u32 2, %s20
        %p269 = scmp.lt.s32.totalorder %s268, 3
        %s270 = scalar_select %p269, %s268, 3
        %s271 = smul.addr %s270, 8
        %s272 = scalar_lea.vmem %s3, %s271
        %s273 = smul.u32 2, %s20
        %s274 = smul.u32 2, %s20
        %v276 = vld [vmem:[%s266] sm:$0xf]
        %v277 = vld [vmem:[%s266 + $0x4] sm:$0xf]
        %v278 = vld [vmem:[%s1] sm:$0xf]
        %v279 = vld [vmem:[%s1 + $0x4] sm:$0xf]
        %v280 = vld [vmem:[%s1 + $0x8] sm:$0xf]
        %v281 = vld [vmem:[%s1 + $0xc] sm:$0xf]
        %v282 = vld [vmem:[%s1 + $0x10] sm:$0xf]
        %v283 = vld [vmem:[%s1 + $0x14] sm:$0xf]
        %v284 = vld [vmem:[%s1 + $0x18] sm:$0xf]
        %v285 = vld [vmem:[%s1 + $0x1c] sm:$0xf]
        %v286 = vld [vmem:[%s1 + $0x20] sm:$0xf]
        %v287 = vld [vmem:[%s1 + $0x24] sm:$0xf]
        %v288 = vld [vmem:[%s1 + $0x28] sm:$0xf]
        %v289 = vld [vmem:[%s1 + $0x2c] sm:$0xf]
        %v290 = vld [vmem:[%s1 + $0x30] sm:$0xf]
        %v291 = vld [vmem:[%s1 + $0x34] sm:$0xf]
        %v292 = vld [vmem:[%s1 + $0x38] sm:$0xf]
        %v293 = vld [vmem:[%s1 + $0x3c] sm:$0xf]
        %v294 = vld [vmem:[%s2] sm:$0x1]
        %v296 = vlaneseq
        %v297 = vshrl.u32 %v296, 7
        %v298 = vsub.s32 0, %v297
        %v299 = vrot.slane %v294, %v298
        %v303 = vunpack.c.l.b16 %v276
        %v304 = vunpack.c.l.b16 %v277
        %v305 = vpack.c.b16 %v304, %v303
        %v323 = vunpack.c.l.b16 %v278
        %v324 = vunpack.c.l.b16 %v279
        %v325 = vunpack.c.l.b16 %v280
        %v326 = vunpack.c.l.b16 %v281
        %v327 = vunpack.c.l.b16 %v282
        %v328 = vunpack.c.l.b16 %v283
        %v329 = vunpack.c.l.b16 %v284
        %v330 = vunpack.c.l.b16 %v285
        %v331 = vunpack.c.l.b16 %v286
        %v332 = vunpack.c.l.b16 %v287
        %v333 = vunpack.c.l.b16 %v288
        %v334 = vunpack.c.l.b16 %v289
        %v335 = vunpack.c.l.b16 %v290
        %v336 = vunpack.c.l.b16 %v291
        %v337 = vunpack.c.l.b16 %v292
        %v338 = vunpack.c.l.b16 %v293
        %v339 = vpack.c.b16 %v324, %v323
        %v340 = vpack.c.b16 %v326, %v325
        %v341 = vpack.c.b16 %v328, %v327
        %v342 = vpack.c.b16 %v330, %v329
        %v343 = vpack.c.b16 %v332, %v331
        %v344 = vpack.c.b16 %v334, %v333
        %v345 = vpack.c.b16 %v336, %v335
        %v346 = vpack.c.b16 %v338, %v337
        %355 = vmatprep.subr.bf16.mxu0 0
        %356 = vmatpush1.bf16.msra.mxu0 %v339
        %357 = vmatprep.subr.bf16.mxu0 0
        %358 = vmatpush1.bf16.msra.mxu0 %v340
        %359 = vmatprep.subr.bf16.mxu0 0
        %360 = vmatpush1.bf16.msra.mxu0 %v341
        %361 = vmatprep.subr.bf16.mxu0 0
        %362 = vmatpush1.bf16.msra.mxu0 %v342
        %363 = vmatprep.subr.bf16.mxu0 0
        %364 = vmatpush1.bf16.msra.mxu0 %v343
        %365 = vmatprep.subr.bf16.mxu0 0
        %366 = vmatpush1.bf16.msra.mxu0 %v344
        %367 = vmatprep.subr.bf16.mxu0 0
        %368 = vmatpush1.bf16.msra.mxu0 %v345
        %369 = vmatprep.subr.bf16.mxu0 0
        %370 = vmatpush1.bf16.msra.mxu0 %v346
        %371 = vmatprep.subr.bf16.mxu0 0
        %372 = vmatpush1.bf16.msra.mxu0 0
        %373 = vmatprep.subr.bf16.mxu0 0
        %374 = vmatpush1.bf16.msra.mxu0 0
        %375 = vmatprep.subr.bf16.mxu0 0
        %376 = vmatpush1.bf16.msra.mxu0 0
        %377 = vmatprep.subr.bf16.mxu0 0
        %378 = vmatpush1.bf16.msra.mxu0 0
        %379 = vmatprep.subr.bf16.mxu0 0
        %380 = vmatpush1.bf16.msra.mxu0 0
        %381 = vmatprep.subr.bf16.mxu0 0
        %382 = vmatpush1.bf16.msra.mxu0 0
        %383 = vmatprep.subr.bf16.mxu0 0
        %384 = vmatpush1.bf16.msra.mxu0 0
        %385 = vmatprep.subr.bf16.mxu0 0
        %386 = vmatpush1.bf16.msra.mxu0 0
        %387 = vmatprep.mubr.bf16.mxu0 0
        %388 = vmatmul.mubr.bf16.gmra.mrb[0].mxu0 %v305
        %v389 = vpop.f32.mrb[0].mxu0
        %v390 = vadd.f32 %v299, %v389
        %v391 = vpop.f32.mrb[0].mxu0
        %v392 = vpop.f32.mrb[0].mxu0
        %v393 = vadd.f32 %v299, %v392
        %v394 = vpop.f32.mrb[0].mxu0
        %395 = vdwg.mxu0
        %v396 = vld [vmem:[%s272] sm:$0xff]
        %v397 = vld [vmem:[%s272 + $0x8] sm:$0xff]
        %v398 = vadd.f32 %v390, %v396
        %v399 = vadd.f32 %v393, %v397
        %vm400 = vcmask 261120
        %v401 = vsel %vm400, %v398, 0.0
        %402 = vadd.xlane.f32.xlu0 %v401
        %v403 = vpop.xlane.xlu0 %402
        %v404 = vsel %vm400, %v399, 0.0
        %405 = vadd.xlane.f32.xlu0 %v404
        %v406 = vpop.xlane.xlu0 %405
        %v407 = vrcp.pop 32.0
        %v408 = vmul.f32 %v403, %v407
        %v409 = vmul.f32 %v406, %v407
        %v410 = vsub.f32 %v398, %v408
        %v411 = vsub.f32 %v399, %v409
        %v412 = vmul.f32 %v410, %v410
        %v413 = vmul.f32 %v411, %v411
        %v414 = vsel %vm400, %v412, 0.0
        %415 = vadd.xlane.f32.xlu0 %v414
        %v416 = vpop.xlane.xlu0 %415
        %v417 = vsel %vm400, %v413, 0.0
        %418 = vadd.xlane.f32.xlu0 %v417
        %v419 = vpop.xlane.xlu0 %418
        %v420 = vmul.f32 %v416, %v407
        %v421 = vmul.f32 %v419, %v407
        %v422 = vadd.f32 %v420, 1e-12
        %v423 = vadd.f32 %v421, 1e-12
        %v424 = vrsqrt.pop %v422
        %v425 = vrsqrt.pop %v423
        %v426 = vmul.f32 %v410, %v424
        %v427 = vmul.f32 %v411, %v425
        %v428 = vld [vmem:[%s4] sm:$0x1]
        %v430 = vlaneseq
        %v431 = vshrl.u32 %v430, 7
        %v432 = vsub.s32 0, %v431
        %v433 = vrot.slane %v428, %v432
        %v435 = vmul.f32 %v426, %v433
        %v436 = vmul.f32 %v427, %v433
        %v437 = vld [vmem:[%s5] sm:$0x1]
        %v439 = vlaneseq
        %v440 = vshrl.u32 %v439, 7
        %v441 = vsub.s32 0, %v440
        %v442 = vrot.slane %v437, %v441
        %v444 = vadd.f32 %v435, %v442
        %v445 = vadd.f32 %v436, %v442
        %446 = vst.msk [vmem:[%s261] sm:$0xff] %vm400, %v444
        %447 = vst.msk [vmem:[%s261 + $0x8] sm:$0xff] %vm400, %v445
        %s448 = sand.u32 %s164, 1
        %s449 = scalar_lea.sflag [#allocation3], %s448
        %s450 = sand.u32 %s164, 1
        %s451 = smul.addr %s450, 16
        %s452 = scalar_lea.vmem [#allocation2], %s451
        // Predicated region
        $region45: #{bert_layer_forward.9} parent=43 // pred_check
          %p453 = pneg %p174
        $region46: #{bert_layer_forward.9} parent=43 // pred_check_branch
          %455 = sbr.rel (%p453) target = $region48
        $region47: #{bert_layer_forward.9} parent=43 // pred_region
          %s456 = smul.u32 2, %s20
          %s458 = ssub.s32 256, 256
          %459 = vsyncadd %s449, %s458
          %s460 = smul.addr %s456, 128
          %s461 = scalar_lea.hbm %s6, %s460
          %s462 = sshll.u32 %s452, 4
          %s463 = int_to_ptr.vmem [resolvable:$true] %s462
          %468 = dma.vmem_to_hbm [thread:$0]  %s463, 256, %s461, %s449, 128, 128, 8
        $region48: #{bert_layer_forward.9} parent=43 // pred_fallthru
          _
      $region44: #{bert_layer_forward.9} parent=5 // pred_fallthru
        _
      %p469 = scmp.le.s32.totalorder 2, %s15
      // Predicated region
      $region49: #{bert_layer_forward.9} parent=5 // pred_check
        %p470 = pneg %p469
      $region50: #{bert_layer_forward.9} parent=5 // pred_check_branch
        %472 = sbr.rel (%p470) target = $region52
      $region51: #{bert_layer_forward.9} parent=5 // pred_region
        %s473 = ssub.s32 %s15, 2
        // Predicated region
        $region53: #{bert_layer_forward.9} parent=51 // pred_check
          %p474 = pneg %p180
        $region54: #{bert_layer_forward.9} parent=51 // pred_check_branch
          %476 = sbr.rel (%p474) target = $region56
        $region55: #{bert_layer_forward.9} parent=51 // pred_region
          %s477 = sand.u32 %s165, 1
          %s478 = scalar_lea.sflag [#allocation3], %s477
          %s479 = sand.u32 %s165, 1
          %s480 = smul.addr %s479, 16
          %s481 = scalar_lea.vmem [#allocation2], %s480
          %482 = dma.done %s478, 256
        $region56: #{bert_layer_forward.9} parent=51 // pred_fallthru
          _
      $region52: #{bert_layer_forward.9} parent=5 // pred_fallthru
        _
    $region6: #{bert_layer_forward.9} parent=1 // loop_footer
      %s19 = sadd.s32 1, %s15
    $region7: #{bert_layer_forward.9} parent=1 // loop_footer_branch
      %14 = sbr.rel target = $region3
    $region8: #{bert_layer_forward.9} parent=1 // loop_exit
      _
    %483 = vsyncpa [#allocation3], 1
    %s484 = scalar_lea.sflag [#allocation3], 1
    %485 = vsyncpa %s484, 1

</llo_original>
